<compile_context>
chip_gen: v5e
topology: v5e:2x2
jax: 0.10.0
libtpu: 0.0.40
codegen_flags: <defaults>
</compile_context>

<pallas_src>
import jax
import jax.numpy as jnp
from jax.experimental import pallas as pl
from jax.experimental.pallas import tpu as pltpu

# --- small but module-consistent hyper-parameters ---
B, N = 2, 8        # batch, pair-representation size (i and j)
C_Z = 128          # pair channel dim (lane-dense last dim)
C = 32             # hidden channel c of the triangle update
LN_EPS = 1e-5      # PyTorch nn.LayerNorm default eps


def _sigmoid(x):
    return 1.0 / (1.0 + jnp.exp(-x))


def _layer_norm(x, w, b):
    mu = jnp.mean(x, axis=-1, keepdims=True)
    var = jnp.mean((x - mu) ** 2, axis=-1, keepdims=True)
    return (x - mu) * jax.lax.rsqrt(var + LN_EPS) * w + b


def tri_mul_incoming_kernel(z_ref, lnw_ref, lnb_ref,
                            w1a_ref, w1b_ref, w2a_ref, w2b_ref, w3_ref,
                            ln4w_ref, ln4b_ref, w4_ref, o_ref):
    _, Nn, _, cz = z_ref.shape           # block is one batch: (1, N, N, c_z)
    c = w1a_ref.shape[1]
    R = Nn * Nn

    # ---- LayerNorm + channel projections for all N*N rows of this batch (MXU) ----
    z = z_ref[...].reshape(R, cz)                                    # [N*N, c_z]
    zn = _layer_norm(z, lnw_ref[...], lnb_ref[...])

    a = _sigmoid(jnp.dot(zn, w1a_ref[...], preferred_element_type=jnp.float32)) \
        * jnp.dot(zn, w2a_ref[...], preferred_element_type=jnp.float32)          # [N*N, c]
    bm = _sigmoid(jnp.dot(zn, w1b_ref[...], preferred_element_type=jnp.float32)) \
        * jnp.dot(zn, w2b_ref[...], preferred_element_type=jnp.float32)          # [N*N, c]
    g = _sigmoid(jnp.dot(zn, w3_ref[...], preferred_element_type=jnp.float32))   # [N*N, c_z]

    a3 = a.reshape(Nn, Nn, c)
    b3 = bm.reshape(Nn, Nn, c)

    # ---- incoming triangle: tri[i, j, ch] = sum_k a[k, i, ch] * b[k, j, ch] ----
    # (c stays on lanes; unrolled VPU multiply-accumulate over the tiny k axis)
    tri = a3[0, :, None, :] * b3[0, None, :, :]
    for k in range(1, Nn):
        tri = tri + a3[k, :, None, :] * b3[k, None, :, :]
    # TODO(synk): at real AlphaFold N, replace this with per-channel MXU matmuls
    # (f32 VMEM accumulator) and grid over (i, j, k) blocks.

    # ---- post-LN + output projection + gate ----
    trin = _layer_norm(tri.reshape(R, c), ln4w_ref[...], ln4b_ref[...])
    out = g * jnp.dot(trin, w4_ref[...], preferred_element_type=jnp.float32)     # [N*N, c_z]
    o_ref[...] = out.reshape(1, Nn, Nn, cz)


def triangle_multiplication_incoming(z, ln_w, ln_b,
                                     w1a_t, w1b_t, w2a_t, w2b_t, w3_t,
                                     ln4_w, ln4_b, w4_t):
    Bb, Nn, _, cz = z.shape
    c = w4_t.shape[0]
    Rt = Bb * Nn * Nn

    flops = int(2 * Rt * cz * (4 * c + cz)     # a/b/g projections
                + 2 * Bb * Nn * Nn * Nn * c    # triangle contraction
                + 2 * Rt * c * cz)             # final linear
    transcendentals = int(Rt * (2 * c + cz))   # sigmoids
    bytes_accessed = int(4 * (2 * z.size + w1a_t.size + w1b_t.size + w2a_t.size
                              + w2b_t.size + w3_t.size + w4_t.size
                              + 2 * cz + 2 * c))

    def _resident(shape):
        # weight / param block: full array, same block every grid step
        nd = len(shape)
        return pl.BlockSpec(shape, lambda b, _nd=nd: (0,) * _nd)

    grid_spec = pltpu.PrefetchScalarGridSpec(
        num_scalar_prefetch=0,
        grid=(Bb,),
        in_specs=[
            pl.BlockSpec((1, Nn, Nn, cz), lambda b: (b, 0, 0, 0)),   # z (per batch)
            _resident((1, cz)), _resident((1, cz)),                  # ln w/b
            _resident((cz, c)), _resident((cz, c)),                  # w1a, w1b
            _resident((cz, c)), _resident((cz, c)),                  # w2a, w2b
            _resident((cz, cz)),                                     # w3
            _resident((1, c)), _resident((1, c)),                    # ln4 w/b
            _resident((c, cz)),                                      # w4
        ],
        out_specs=pl.BlockSpec((1, Nn, Nn, cz), lambda b: (b, 0, 0, 0)),
    )

    return pl.pallas_call(
        tri_mul_incoming_kernel,
        out_shape=jax.ShapeDtypeStruct(z.shape, jnp.float32),
        grid_spec=grid_spec,
        compiler_params=pltpu.CompilerParams(
            dimension_semantics=("parallel",)),
        cost_estimate=pl.CostEstimate(flops=flops,
                                      transcendentals=transcendentals,
                                      bytes_accessed=bytes_accessed),
    )(z, ln_w.reshape(1, cz), ln_b.reshape(1, cz),
      w1a_t, w1b_t, w2a_t, w2b_t, w3_t,
      ln4_w.reshape(1, c), ln4_b.reshape(1, c), w4_t)


def reference(z, ln_w, ln_b, w1, w2, w3, ln4_w, ln4_b, w4, c):
    # plain-JAX mirror of the PyTorch forward
    def ln(x, w, b):
        mu = jnp.mean(x, axis=-1, keepdims=True)
        var = jnp.mean((x - mu) ** 2, axis=-1, keepdims=True)
        return (x - mu) / jnp.sqrt(var + LN_EPS) * w + b

    zn = ln(z, ln_w, ln_b)
    ab = jax.nn.sigmoid(zn @ w1.T) * (zn @ w2.T)
    a, b_ = ab[..., :c], ab[..., c:]
    g = jax.nn.sigmoid(zn @ w3.T)
    # (a.permute(0,3,2,1) @ b.permute(0,3,1,2)).permute(0,2,3,1)
    tri = jnp.einsum('bkic,bkjc->bijc', a, b_)
    return g * (ln(tri, ln4_w, ln4_b) @ w4.T)


if __name__ == "__main__":
    key = jax.random.PRNGKey(0)
    ks = jax.random.split(key, 10)

    # inputs / parameters (PyTorch layouts: Linear.weight is [out, in])
    z     = jax.random.normal(ks[0], (B, N, N, C_Z), jnp.float32)
    ln_w  = 1.0 + 0.1 * jax.random.normal(ks[1], (C_Z,), jnp.float32)
    ln_b  = 0.1 * jax.random.normal(ks[2], (C_Z,), jnp.float32)
    w1    = jax.random.normal(ks[3], (2 * C, C_Z), jnp.float32) * 0.1   # Linear(c_z, 2c, bias=False)
    w2    = jax.random.normal(ks[4], (2 * C, C_Z), jnp.float32) * 0.1   # Linear(c_z, 2c, bias=False)
    w3    = jax.random.normal(ks[5], (C_Z, C_Z), jnp.float32) * 0.05    # Linear(c_z, c_z, bias=False)
    ln4_w = 1.0 + 0.1 * jax.random.normal(ks[6], (C,), jnp.float32)     # LayerNorm([c]) inside lnb_4
    ln4_b = 0.1 * jax.random.normal(ks[7], (C,), jnp.float32)
    w4    = jax.random.normal(ks[8], (C_Z, C), jnp.float32) * 0.05      # Linear(c, c_z, bias=False)

    # one-time weight prep (store these as the parameters in a real model):
    # split W1/W2 into their a/b halves and pre-transpose everything.
    w1a_t, w1b_t = w1[:C].T, w1[C:].T
    w2a_t, w2b_t = w2[:C].T, w2[C:].T
    w3_t, w4_t = w3.T, w4.T

    z_out = triangle_multiplication_incoming(
        z, ln_w, ln_b, w1a_t, w1b_t, w2a_t, w2b_t, w3_t, ln4_w, ln4_b, w4_t)
    jax.block_until_ready(z_out)

    z_ref = reference(z, ln_w, ln_b, w1, w2, w3, ln4_w, ln4_b, w4, C)
    assert z_out.shape == (B, N, N, C_Z), z_out.shape
    max_err = float(jnp.max(jnp.abs(z_out - z_ref)))
    assert jnp.allclose(z_out, z_ref, atol=2e-3, rtol=2e-3), max_err
    print("KERNEL_OK")
</pallas_src>

<mosaic_0001>
module attributes {stable_mosaic.version = 11 : i64} {
  func.func @tri_mul_incoming_kernel(%arg0: i32, %arg1: memref<1x8x8x128xf32, #tpu.memory_space<vmem>>, %arg2: memref<1x128xf32, #tpu.memory_space<vmem>>, %arg3: memref<1x128xf32, #tpu.memory_space<vmem>>, %arg4: memref<128x32xf32, #tpu.memory_space<vmem>>, %arg5: memref<128x32xf32, #tpu.memory_space<vmem>>, %arg6: memref<128x32xf32, #tpu.memory_space<vmem>>, %arg7: memref<128x32xf32, #tpu.memory_space<vmem>>, %arg8: memref<128x128xf32, #tpu.memory_space<vmem>>, %arg9: memref<1x32xf32, #tpu.memory_space<vmem>>, %arg10: memref<1x32xf32, #tpu.memory_space<vmem>>, %arg11: memref<32x128xf32, #tpu.memory_space<vmem>>, %arg12: memref<1x8x8x128xf32, #tpu.memory_space<vmem>>) attributes {dimension_semantics = [#tpu.dimension_semantics<parallel>], iteration_bounds = array<i64: 2>, scalar_prefetch = 0 : i64, scratch_operands = 0 : i64, tpu.core_type = #tpu.core_type<tc>, window_params = [{transform_indices = @transform_0, window_bounds = array<i64: 1, 8, 8, 128>}, {pipeline_mode = #tpu.pipeline_mode<synchronous>, transform_indices = @transform_1, window_bounds = array<i64: 1, 128>}, {pipeline_mode = #tpu.pipeline_mode<synchronous>, transform_indices = @transform_2, window_bounds = array<i64: 1, 128>}, {pipeline_mode = #tpu.pipeline_mode<synchronous>, transform_indices = @transform_3, window_bounds = array<i64: 128, 32>}, {pipeline_mode = #tpu.pipeline_mode<synchronous>, transform_indices = @transform_4, window_bounds = array<i64: 128, 32>}, {pipeline_mode = #tpu.pipeline_mode<synchronous>, transform_indices = @transform_5, window_bounds = array<i64: 128, 32>}, {pipeline_mode = #tpu.pipeline_mode<synchronous>, transform_indices = @transform_6, window_bounds = array<i64: 128, 32>}, {pipeline_mode = #tpu.pipeline_mode<synchronous>, transform_indices = @transform_7, window_bounds = array<i64: 128, 128>}, {pipeline_mode = #tpu.pipeline_mode<synchronous>, transform_indices = @transform_8, window_bounds = array<i64: 1, 32>}, {pipeline_mode = #tpu.pipeline_mode<synchronous>, transform_indices = @transform_9, window_bounds = array<i64: 1, 32>}, {pipeline_mode = #tpu.pipeline_mode<synchronous>, transform_indices = @transform_10, window_bounds = array<i64: 32, 128>}, {transform_indices = @transform_11, window_bounds = array<i64: 1, 8, 8, 128>}]} {
    %c0 = arith.constant 0 : index
    %c0_0 = arith.constant 0 : index
    %c0_1 = arith.constant 0 : index
    %c0_2 = arith.constant 0 : index
    %0 = vector.load %arg1[%c0, %c0_0, %c0_1, %c0_2] : memref<1x8x8x128xf32, #tpu.memory_space<vmem>>, vector<1x8x8x128xf32>
    %1 = vector.shape_cast %0 : vector<1x8x8x128xf32> to vector<64x128xf32>
    %c0_3 = arith.constant 0 : index
    %c0_4 = arith.constant 0 : index
    %2 = vector.load %arg2[%c0_3, %c0_4] : memref<1x128xf32, #tpu.memory_space<vmem>>, vector<1x128xf32>
    %c0_5 = arith.constant 0 : index
    %c0_6 = arith.constant 0 : index
    %3 = vector.load %arg3[%c0_5, %c0_6] : memref<1x128xf32, #tpu.memory_space<vmem>>, vector<1x128xf32>
    %cst = arith.constant dense<0.000000e+00> : vector<64xf32>
    %4 = vector.multi_reduction <add>, %1, %cst [1] : vector<64x128xf32> to vector<64xf32>
    %5 = vector.shape_cast %4 : vector<64xf32> to vector<64x1xf32>
    %cst_7 = arith.constant 1.280000e+02 : f32
    %6 = vector.broadcast %cst_7 : f32 to vector<64x1xf32>
    %7 = arith.divf %5, %6 : vector<64x1xf32>
    %8 = vector.broadcast %7 : vector<64x1xf32> to vector<64x128xf32>
    %9 = arith.subf %1, %8 : vector<64x128xf32>
    %10 = arith.mulf %9, %9 : vector<64x128xf32>
    %cst_8 = arith.constant dense<0.000000e+00> : vector<64xf32>
    %11 = vector.multi_reduction <add>, %10, %cst_8 [1] : vector<64x128xf32> to vector<64xf32>
    %12 = vector.shape_cast %11 : vector<64xf32> to vector<64x1xf32>
    %cst_9 = arith.constant 1.280000e+02 : f32
    %13 = vector.broadcast %cst_9 : f32 to vector<64x1xf32>
    %14 = arith.divf %12, %13 : vector<64x1xf32>
    %15 = vector.broadcast %7 : vector<64x1xf32> to vector<64x128xf32>
    %16 = arith.subf %1, %15 : vector<64x128xf32>
    %cst_10 = arith.constant 9.99999974E-6 : f32
    %17 = vector.broadcast %cst_10 : f32 to vector<64x1xf32>
    %18 = arith.addf %14, %17 : vector<64x1xf32>
    %19 = math.rsqrt %18 : vector<64x1xf32>
    %20 = vector.broadcast %19 : vector<64x1xf32> to vector<64x128xf32>
    %21 = arith.mulf %16, %20 : vector<64x128xf32>
    %22 = vector.broadcast %2 : vector<1x128xf32> to vector<64x128xf32>
    %23 = arith.mulf %21, %22 : vector<64x128xf32>
    %24 = vector.broadcast %3 : vector<1x128xf32> to vector<64x128xf32>
    %25 = arith.addf %23, %24 : vector<64x128xf32>
    %c0_11 = arith.constant 0 : index
    %c0_12 = arith.constant 0 : index
    %26 = vector.load %arg4[%c0_11, %c0_12] : memref<128x32xf32, #tpu.memory_space<vmem>>, vector<128x32xf32>
    %cst_13 = arith.constant dense<0.000000e+00> : vector<64x32xf32>
    %27 = tpu.matmul %25, %26, %cst_13 {dimension_numbers = #tpu.dot_dimension_numbers<[1], [0], [0], [1], [0, 0, 1, 1], [], []>} : vector<64x128xf32>, vector<128x32xf32>, vector<64x32xf32> -> vector<64x32xf32>
    %cst_14 = arith.constant 0.000000e+00 : f32
    %28 = vector.broadcast %cst_14 : f32 to vector<64x32xf32>
    %29 = arith.subf %28, %27 : vector<64x32xf32>
    %30 = math.exp %29 : vector<64x32xf32>
    %cst_15 = arith.constant 1.000000e+00 : f32
    %31 = vector.broadcast %cst_15 : f32 to vector<64x32xf32>
    %32 = arith.addf %31, %30 : vector<64x32xf32>
    %cst_16 = arith.constant 1.000000e+00 : f32
    %33 = vector.broadcast %cst_16 : f32 to vector<64x32xf32>
    %34 = arith.divf %33, %32 : vector<64x32xf32>
    %c0_17 = arith.constant 0 : index
    %c0_18 = arith.constant 0 : index
    %35 = vector.load %arg6[%c0_17, %c0_18] : memref<128x32xf32, #tpu.memory_space<vmem>>, vector<128x32xf32>
    %cst_19 = arith.constant dense<0.000000e+00> : vector<64x32xf32>
    %36 = tpu.matmul %25, %35, %cst_19 {dimension_numbers = #tpu.dot_dimension_numbers<[1], [0], [0], [1], [0, 0, 1, 1], [], []>} : vector<64x128xf32>, vector<128x32xf32>, vector<64x32xf32> -> vector<64x32xf32>
    %37 = arith.mulf %34, %36 : vector<64x32xf32>
    %c0_20 = arith.constant 0 : index
    %c0_21 = arith.constant 0 : index
    %38 = vector.load %arg5[%c0_20, %c0_21] : memref<128x32xf32, #tpu.memory_space<vmem>>, vector<128x32xf32>
    %cst_22 = arith.constant dense<0.000000e+00> : vector<64x32xf32>
    %39 = tpu.matmul %25, %38, %cst_22 {dimension_numbers = #tpu.dot_dimension_numbers<[1], [0], [0], [1], [0, 0, 1, 1], [], []>} : vector<64x128xf32>, vector<128x32xf32>, vector<64x32xf32> -> vector<64x32xf32>
    %cst_23 = arith.constant 0.000000e+00 : f32
    %40 = vector.broadcast %cst_23 : f32 to vector<64x32xf32>
    %41 = arith.subf %40, %39 : vector<64x32xf32>
    %42 = math.exp %41 : vector<64x32xf32>
    %cst_24 = arith.constant 1.000000e+00 : f32
    %43 = vector.broadcast %cst_24 : f32 to vector<64x32xf32>
    %44 = arith.addf %43, %42 : vector<64x32xf32>
    %cst_25 = arith.constant 1.000000e+00 : f32
    %45 = vector.broadcast %cst_25 : f32 to vector<64x32xf32>
    %46 = arith.divf %45, %44 : vector<64x32xf32>
    %c0_26 = arith.constant 0 : index
    %c0_27 = arith.constant 0 : index
    %47 = vector.load %arg7[%c0_26, %c0_27] : memref<128x32xf32, #tpu.memory_space<vmem>>, vector<128x32xf32>
    %cst_28 = arith.constant dense<0.000000e+00> : vector<64x32xf32>
    %48 = tpu.matmul %25, %47, %cst_28 {dimension_numbers = #tpu.dot_dimension_numbers<[1], [0], [0], [1], [0, 0, 1, 1], [], []>} : vector<64x128xf32>, vector<128x32xf32>, vector<64x32xf32> -> vector<64x32xf32>
    %49 = arith.mulf %46, %48 : vector<64x32xf32>
    %c0_29 = arith.constant 0 : index
    %c0_30 = arith.constant 0 : index
    %50 = vector.load %arg8[%c0_29, %c0_30] : memref<128x128xf32, #tpu.memory_space<vmem>>, vector<128x128xf32>
    %cst_31 = arith.constant dense<0.000000e+00> : vector<64x128xf32>
    %51 = tpu.matmul %25, %50, %cst_31 {dimension_numbers = #tpu.dot_dimension_numbers<[1], [0], [0], [1], [0, 0, 1, 1], [], []>} : vector<64x128xf32>, vector<128x128xf32>, vector<64x128xf32> -> vector<64x128xf32>
    %cst_32 = arith.constant 0.000000e+00 : f32
    %52 = vector.broadcast %cst_32 : f32 to vector<64x128xf32>
    %53 = arith.subf %52, %51 : vector<64x128xf32>
    %54 = math.exp %53 : vector<64x128xf32>
    %cst_33 = arith.constant 1.000000e+00 : f32
    %55 = vector.broadcast %cst_33 : f32 to vector<64x128xf32>
    %56 = arith.addf %55, %54 : vector<64x128xf32>
    %cst_34 = arith.constant 1.000000e+00 : f32
    %57 = vector.broadcast %cst_34 : f32 to vector<64x128xf32>
    %58 = arith.divf %57, %56 : vector<64x128xf32>
    %59 = vector.shape_cast %37 : vector<64x32xf32> to vector<8x8x32xf32>
    %60 = vector.shape_cast %49 : vector<64x32xf32> to vector<8x8x32xf32>
    %61 = vector.extract_strided_slice %59 {offsets = [0, 0, 0], sizes = [1, 8, 32], strides = [1, 1, 1]} : vector<8x8x32xf32> to vector<1x8x32xf32>
    %62 = vector.shape_cast %61 : vector<1x8x32xf32> to vector<8x32xf32>
    %63 = vector.shape_cast %62 : vector<8x32xf32> to vector<8x1x32xf32>
    %64 = vector.extract_strided_slice %60 {offsets = [0, 0, 0], sizes = [1, 8, 32], strides = [1, 1, 1]} : vector<8x8x32xf32> to vector<1x8x32xf32>
    %65 = vector.shape_cast %64 : vector<1x8x32xf32> to vector<8x32xf32>
    %66 = vector.shape_cast %65 : vector<8x32xf32> to vector<1x8x32xf32>
    %67 = vector.broadcast %63 : vector<8x1x32xf32> to vector<8x8x32xf32>
    %68 = vector.broadcast %66 : vector<1x8x32xf32> to vector<8x8x32xf32>
    %69 = arith.mulf %67, %68 : vector<8x8x32xf32>
    %70 = vector.extract_strided_slice %59 {offsets = [1, 0, 0], sizes = [1, 8, 32], strides = [1, 1, 1]} : vector<8x8x32xf32> to vector<1x8x32xf32>
    %71 = vector.shape_cast %70 : vector<1x8x32xf32> to vector<8x32xf32>
    %72 = vector.shape_cast %71 : vector<8x32xf32> to vector<8x1x32xf32>
    %73 = vector.extract_strided_slice %60 {offsets = [1, 0, 0], sizes = [1, 8, 32], strides = [1, 1, 1]} : vector<8x8x32xf32> to vector<1x8x32xf32>
    %74 = vector.shape_cast %73 : vector<1x8x32xf32> to vector<8x32xf32>
    %75 = vector.shape_cast %74 : vector<8x32xf32> to vector<1x8x32xf32>
    %76 = vector.broadcast %72 : vector<8x1x32xf32> to vector<8x8x32xf32>
    %77 = vector.broadcast %75 : vector<1x8x32xf32> to vector<8x8x32xf32>
    %78 = arith.mulf %76, %77 : vector<8x8x32xf32>
    %79 = arith.addf %69, %78 : vector<8x8x32xf32>
    %80 = vector.extract_strided_slice %59 {offsets = [2, 0, 0], sizes = [1, 8, 32], strides = [1, 1, 1]} : vector<8x8x32xf32> to vector<1x8x32xf32>
    %81 = vector.shape_cast %80 : vector<1x8x32xf32> to vector<8x32xf32>
    %82 = vector.shape_cast %81 : vector<8x32xf32> to vector<8x1x32xf32>
    %83 = vector.extract_strided_slice %60 {offsets = [2, 0, 0], sizes = [1, 8, 32], strides = [1, 1, 1]} : vector<8x8x32xf32> to vector<1x8x32xf32>
    %84 = vector.shape_cast %83 : vector<1x8x32xf32> to vector<8x32xf32>
    %85 = vector.shape_cast %84 : vector<8x32xf32> to vector<1x8x32xf32>
    %86 = vector.broadcast %82 : vector<8x1x32xf32> to vector<8x8x32xf32>
    %87 = vector.broadcast %85 : vector<1x8x32xf32> to vector<8x8x32xf32>
    %88 = arith.mulf %86, %87 : vector<8x8x32xf32>
    %89 = arith.addf %79, %88 : vector<8x8x32xf32>
    %90 = vector.extract_strided_slice %59 {offsets = [3, 0, 0], sizes = [1, 8, 32], strides = [1, 1, 1]} : vector<8x8x32xf32> to vector<1x8x32xf32>
    %91 = vector.shape_cast %90 : vector<1x8x32xf32> to vector<8x32xf32>
    %92 = vector.shape_cast %91 : vector<8x32xf32> to vector<8x1x32xf32>
    %93 = vector.extract_strided_slice %60 {offsets = [3, 0, 0], sizes = [1, 8, 32], strides = [1, 1, 1]} : vector<8x8x32xf32> to vector<1x8x32xf32>
    %94 = vector.shape_cast %93 : vector<1x8x32xf32> to vector<8x32xf32>
    %95 = vector.shape_cast %94 : vector<8x32xf32> to vector<1x8x32xf32>
    %96 = vector.broadcast %92 : vector<8x1x32xf32> to vector<8x8x32xf32>
    %97 = vector.broadcast %95 : vector<1x8x32xf32> to vector<8x8x32xf32>
    %98 = arith.mulf %96, %97 : vector<8x8x32xf32>
    %99 = arith.addf %89, %98 : vector<8x8x32xf32>
    %100 = vector.extract_strided_slice %59 {offsets = [4, 0, 0], sizes = [1, 8, 32], strides = [1, 1, 1]} : vector<8x8x32xf32> to vector<1x8x32xf32>
    %101 = vector.shape_cast %100 : vector<1x8x32xf32> to vector<8x32xf32>
    %102 = vector.shape_cast %101 : vector<8x32xf32> to vector<8x1x32xf32>
    %103 = vector.extract_strided_slice %60 {offsets = [4, 0, 0], sizes = [1, 8, 32], strides = [1, 1, 1]} : vector<8x8x32xf32> to vector<1x8x32xf32>
    %104 = vector.shape_cast %103 : vector<1x8x32xf32> to vector<8x32xf32>
    %105 = vector.shape_cast %104 : vector<8x32xf32> to vector<1x8x32xf32>
    %106 = vector.broadcast %102 : vector<8x1x32xf32> to vector<8x8x32xf32>
    %107 = vector.broadcast %105 : vector<1x8x32xf32> to vector<8x8x32xf32>
    %108 = arith.mulf %106, %107 : vector<8x8x32xf32>
    %109 = arith.addf %99, %108 : vector<8x8x32xf32>
    %110 = vector.extract_strided_slice %59 {offsets = [5, 0, 0], sizes = [1, 8, 32], strides = [1, 1, 1]} : vector<8x8x32xf32> to vector<1x8x32xf32>
    %111 = vector.shape_cast %110 : vector<1x8x32xf32> to vector<8x32xf32>
    %112 = vector.shape_cast %111 : vector<8x32xf32> to vector<8x1x32xf32>
    %113 = vector.extract_strided_slice %60 {offsets = [5, 0, 0], sizes = [1, 8, 32], strides = [1, 1, 1]} : vector<8x8x32xf32> to vector<1x8x32xf32>
    %114 = vector.shape_cast %113 : vector<1x8x32xf32> to vector<8x32xf32>
    %115 = vector.shape_cast %114 : vector<8x32xf32> to vector<1x8x32xf32>
    %116 = vector.broadcast %112 : vector<8x1x32xf32> to vector<8x8x32xf32>
    %117 = vector.broadcast %115 : vector<1x8x32xf32> to vector<8x8x32xf32>
    %118 = arith.mulf %116, %117 : vector<8x8x32xf32>
    %119 = arith.addf %109, %118 : vector<8x8x32xf32>
    %120 = vector.extract_strided_slice %59 {offsets = [6, 0, 0], sizes = [1, 8, 32], strides = [1, 1, 1]} : vector<8x8x32xf32> to vector<1x8x32xf32>
    %121 = vector.shape_cast %120 : vector<1x8x32xf32> to vector<8x32xf32>
    %122 = vector.shape_cast %121 : vector<8x32xf32> to vector<8x1x32xf32>
    %123 = vector.extract_strided_slice %60 {offsets = [6, 0, 0], sizes = [1, 8, 32], strides = [1, 1, 1]} : vector<8x8x32xf32> to vector<1x8x32xf32>
    %124 = vector.shape_cast %123 : vector<1x8x32xf32> to vector<8x32xf32>
    %125 = vector.shape_cast %124 : vector<8x32xf32> to vector<1x8x32xf32>
    %126 = vector.broadcast %122 : vector<8x1x32xf32> to vector<8x8x32xf32>
    %127 = vector.broadcast %125 : vector<1x8x32xf32> to vector<8x8x32xf32>
    %128 = arith.mulf %126, %127 : vector<8x8x32xf32>
    %129 = arith.addf %119, %128 : vector<8x8x32xf32>
    %130 = vector.extract_strided_slice %59 {offsets = [7, 0, 0], sizes = [1, 8, 32], strides = [1, 1, 1]} : vector<8x8x32xf32> to vector<1x8x32xf32>
    %131 = vector.shape_cast %130 : vector<1x8x32xf32> to vector<8x32xf32>
    %132 = vector.shape_cast %131 : vector<8x32xf32> to vector<8x1x32xf32>
    %133 = vector.extract_strided_slice %60 {offsets = [7, 0, 0], sizes = [1, 8, 32], strides = [1, 1, 1]} : vector<8x8x32xf32> to vector<1x8x32xf32>
    %134 = vector.shape_cast %133 : vector<1x8x32xf32> to vector<8x32xf32>
    %135 = vector.shape_cast %134 : vector<8x32xf32> to vector<1x8x32xf32>
    %136 = vector.broadcast %132 : vector<8x1x32xf32> to vector<8x8x32xf32>
    %137 = vector.broadcast %135 : vector<1x8x32xf32> to vector<8x8x32xf32>
    %138 = arith.mulf %136, %137 : vector<8x8x32xf32>
    %139 = arith.addf %129, %138 : vector<8x8x32xf32>
    %140 = vector.shape_cast %139 : vector<8x8x32xf32> to vector<64x32xf32>
    %c0_35 = arith.constant 0 : index
    %c0_36 = arith.constant 0 : index
    %141 = vector.load %arg9[%c0_35, %c0_36] : memref<1x32xf32, #tpu.memory_space<vmem>>, vector<1x32xf32>
    %c0_37 = arith.constant 0 : index
    %c0_38 = arith.constant 0 : index
    %142 = vector.load %arg10[%c0_37, %c0_38] : memref<1x32xf32, #tpu.memory_space<vmem>>, vector<1x32xf32>
    %cst_39 = arith.constant dense<0.000000e+00> : vector<64xf32>
    %143 = vector.multi_reduction <add>, %140, %cst_39 [1] : vector<64x32xf32> to vector<64xf32>
    %144 = vector.shape_cast %143 : vector<64xf32> to vector<64x1xf32>
    %cst_40 = arith.constant 3.200000e+01 : f32
    %145 = vector.broadcast %cst_40 : f32 to vector<64x1xf32>
    %146 = arith.divf %144, %145 : vector<64x1xf32>
    %147 = vector.broadcast %146 : vector<64x1xf32> to vector<64x32xf32>
    %148 = arith.subf %140, %147 : vector<64x32xf32>
    %149 = arith.mulf %148, %148 : vector<64x32xf32>
    %cst_41 = arith.constant dense<0.000000e+00> : vector<64xf32>
    %150 = vector.multi_reduction <add>, %149, %cst_41 [1] : vector<64x32xf32> to vector<64xf32>
    %151 = vector.shape_cast %150 : vector<64xf32> to vector<64x1xf32>
    %cst_42 = arith.constant 3.200000e+01 : f32
    %152 = vector.broadcast %cst_42 : f32 to vector<64x1xf32>
    %153 = arith.divf %151, %152 : vector<64x1xf32>
    %154 = vector.broadcast %146 : vector<64x1xf32> to vector<64x32xf32>
    %155 = arith.subf %140, %154 : vector<64x32xf32>
    %cst_43 = arith.constant 9.99999974E-6 : f32
    %156 = vector.broadcast %cst_43 : f32 to vector<64x1xf32>
    %157 = arith.addf %153, %156 : vector<64x1xf32>
    %158 = math.rsqrt %157 : vector<64x1xf32>
    %159 = vector.broadcast %158 : vector<64x1xf32> to vector<64x32xf32>
    %160 = arith.mulf %155, %159 : vector<64x32xf32>
    %161 = vector.broadcast %141 : vector<1x32xf32> to vector<64x32xf32>
    %162 = arith.mulf %160, %161 : vector<64x32xf32>
    %163 = vector.broadcast %142 : vector<1x32xf32> to vector<64x32xf32>
    %164 = arith.addf %162, %163 : vector<64x32xf32>
    %c0_44 = arith.constant 0 : index
    %c0_45 = arith.constant 0 : index
    %165 = vector.load %arg11[%c0_44, %c0_45] : memref<32x128xf32, #tpu.memory_space<vmem>>, vector<32x128xf32>
    %cst_46 = arith.constant dense<0.000000e+00> : vector<64x128xf32>
    %166 = tpu.matmul %164, %165, %cst_46 {dimension_numbers = #tpu.dot_dimension_numbers<[1], [0], [0], [1], [0, 0, 1, 1], [], []>} : vector<64x32xf32>, vector<32x128xf32>, vector<64x128xf32> -> vector<64x128xf32>
    %167 = arith.mulf %58, %166 : vector<64x128xf32>
    %168 = vector.shape_cast %167 : vector<64x128xf32> to vector<1x8x8x128xf32>
    %c0_47 = arith.constant 0 : index
    %c0_48 = arith.constant 0 : index
    %c0_49 = arith.constant 0 : index
    %c0_50 = arith.constant 0 : index
    %169 = vector.load %arg12[%c0_47, %c0_48, %c0_49, %c0_50] : memref<1x8x8x128xf32, #tpu.memory_space<vmem>>, vector<1x8x8x128xf32>
    tpu.vector_store %arg12[%c0_47, %c0_48, %c0_49, %c0_50], %168 {strides = array<i32>} : memref<1x8x8x128xf32, #tpu.memory_space<vmem>>, vector<1x8x8x128xf32>,
    return
  }
  func.func @transform_0(%arg0: i32) -> (i32, i32, i32, i32) {
    %c0_i32 = arith.constant 0 : i32
    %c0_i32_0 = arith.constant 0 : i32
    %c0_i32_1 = arith.constant 0 : i32
    %c0_i32_2 = arith.constant 0 : i32
    return %arg0, %c0_i32, %c0_i32_0, %c0_i32_1 : i32, i32, i32, i32
  }
  func.func @transform_1(%arg0: i32) -> (i32, i32) {
    %c0_i32 = arith.constant 0 : i32
    %c0_i32_0 = arith.constant 0 : i32
    %c0_i32_1 = arith.constant 0 : i32
    return %c0_i32, %c0_i32_0 : i32, i32
  }
  func.func @transform_2(%arg0: i32) -> (i32, i32) {
    %c0_i32 = arith.constant 0 : i32
    %c0_i32_0 = arith.constant 0 : i32
    %c0_i32_1 = arith.constant 0 : i32
    return %c0_i32, %c0_i32_0 : i32, i32
  }
  func.func @transform_3(%arg0: i32) -> (i32, i32) {
    %c0_i32 = arith.constant 0 : i32
    %c0_i32_0 = arith.constant 0 : i32
    %c0_i32_1 = arith.constant 0 : i32
    return %c0_i32, %c0_i32_0 : i32, i32
  }
  func.func @transform_4(%arg0: i32) -> (i32, i32) {
    %c0_i32 = arith.constant 0 : i32
    %c0_i32_0 = arith.constant 0 : i32
    %c0_i32_1 = arith.constant 0 : i32
    return %c0_i32, %c0_i32_0 : i32, i32
  }
  func.func @transform_5(%arg0: i32) -> (i32, i32) {
    %c0_i32 = arith.constant 0 : i32
    %c0_i32_0 = arith.constant 0 : i32
    %c0_i32_1 = arith.constant 0 : i32
    return %c0_i32, %c0_i32_0 : i32, i32
  }
  func.func @transform_6(%arg0: i32) -> (i32, i32) {
    %c0_i32 = arith.constant 0 : i32
    %c0_i32_0 = arith.constant 0 : i32
    %c0_i32_1 = arith.constant 0 : i32
    return %c0_i32, %c0_i32_0 : i32, i32
  }
  func.func @transform_7(%arg0: i32) -> (i32, i32) {
    %c0_i32 = arith.constant 0 : i32
    %c0_i32_0 = arith.constant 0 : i32
    %c0_i32_1 = arith.constant 0 : i32
    return %c0_i32, %c0_i32_0 : i32, i32
  }
  func.func @transform_8(%arg0: i32) -> (i32, i32) {
    %c0_i32 = arith.constant 0 : i32
    %c0_i32_0 = arith.constant 0 : i32
    %c0_i32_1 = arith.constant 0 : i32
    return %c0_i32, %c0_i32_0 : i32, i32
  }
  func.func @transform_9(%arg0: i32) -> (i32, i32) {
    %c0_i32 = arith.constant 0 : i32
    %c0_i32_0 = arith.constant 0 : i32
    %c0_i32_1 = arith.constant 0 : i32
    return %c0_i32, %c0_i32_0 : i32, i32
  }
  func.func @transform_10(%arg0: i32) -> (i32, i32) {
    %c0_i32 = arith.constant 0 : i32
    %c0_i32_0 = arith.constant 0 : i32
    %c0_i32_1 = arith.constant 0 : i32
    return %c0_i32, %c0_i32_0 : i32, i32
  }
  func.func @transform_11(%arg0: i32) -> (i32, i32, i32, i32) {
    %c0_i32 = arith.constant 0 : i32
    %c0_i32_0 = arith.constant 0 : i32
    %c0_i32_1 = arith.constant 0 : i32
    %c0_i32_2 = arith.constant 0 : i32
    return %arg0, %c0_i32, %c0_i32_0, %c0_i32_1 : i32, i32, i32, i32
  }
}

</mosaic_0001>

<llo_original>
// kernel: tpu_custom_call.1
$region0: #{tpu_custom_call.1}
  #allocation0 [shape = 'u32[]', space=smem, size = 0x4, offset = 0x4, fixed_abs, tag = 'smem constant byte address 0x4 - core index']
  #allocation1 [shape = 'u32[72,128]{1,0:T(1,128)}', space=vmem, size = 0x9000, scoped, tag = 'internal scratch']
  %s0 = inlined_call_operand.vmem [shape: f32[2,8,8,128], index: 0, kind: input, shape index: {}]
  %s1 = inlined_call_operand.vmem [shape: f32[1,128], index: 1, kind: input, shape index: {}]
  %s2 = inlined_call_operand.vmem [shape: f32[1,128], index: 2, kind: input, shape index: {}]
  %s3 = inlined_call_operand.vmem [shape: f32[128,32], index: 3, kind: input, shape index: {}]
  %s4 = inlined_call_operand.vmem [shape: f32[128,32], index: 4, kind: input, shape index: {}]
  %s5 = inlined_call_operand.vmem [shape: f32[128,32], index: 5, kind: input, shape index: {}]
  %s6 = inlined_call_operand.vmem [shape: f32[128,32], index: 6, kind: input, shape index: {}]
  %s7 = inlined_call_operand.vmem [shape: f32[128,128], index: 7, kind: input, shape index: {}]
  %s8 = inlined_call_operand.vmem [shape: f32[1,32], index: 8, kind: input, shape index: {}]
  %s9 = inlined_call_operand.vmem [shape: f32[1,32], index: 9, kind: input, shape index: {}]
  %s10 = inlined_call_operand.vmem [shape: f32[32,128], index: 10, kind: input, shape index: {}]
  %s11 = inlined_call_operand.hbm [shape: f32[2,8,8,128], index: 11, kind: output, shape index: {}]
  %s12 = sld [smem:[#allocation0]]
  $region77: #{tpu_custom_call.1} parent=0
    _
  %s14 = ssub.s32 1, %s12
  %s15 = scalar_select 0, %s14, %s12
  $region1: #{tpu_custom_call.1} parent=0
    #allocation2 [shape = 'u8[65536]{0}', space=vmem, size = 0x10000, scoped, tag = 'output window, operand 0']
    #allocation3 [shape = 's32[2]{0}', space=sflag, size = 0x8, scoped, tag = 'scoped memory for tpu_custom_call.1']
    %16 = vsyncpa [#allocation3], 0
    %s17 = scalar_lea.sflag [#allocation3], 1
    %18 = vsyncpa %s17, 0
    loop: start=0, step=1, limit=4
    $region2: #{tpu_custom_call.1} parent=1 // loop_pre_header
      _
    $region3: #{tpu_custom_call.1} parent=1 // loop_header
      %s20 = sphi 0, %s24
      %p21 = scmp.ge.s32.totalorder %s20, 4
      %s30 = sphi 0, %s32
      %s33 = sphi 0, %s30
      %s34 = sphi 0, %s33
      %s50 = sphi 0, %s34
      %s54 = sphi 0, %s54
      %s56 = sphi 0, %s54
      %s57 = sphi 0, %s56
      %s71 = sphi 0, %s57
      %s75 = sphi 0, %s75
      %s77 = sphi 0, %s75
      %s78 = sphi 0, %s77
      %s92 = sphi 0, %s78
      %s96 = sphi 0, %s96
      %s98 = sphi 0, %s96
      %s99 = sphi 0, %s98
      %s113 = sphi 0, %s99
      %s117 = sphi 0, %s117
      %s119 = sphi 0, %s117
      %s120 = sphi 0, %s119
      %s134 = sphi 0, %s120
      %s138 = sphi 0, %s138
      %s140 = sphi 0, %s138
      %s141 = sphi 0, %s140
      %s155 = sphi 0, %s141
      %s159 = sphi 0, %s159
      %s161 = sphi 0, %s159
      %s162 = sphi 0, %s161
      %s176 = sphi 0, %s162
      %s180 = sphi 0, %s180
      %s182 = sphi 0, %s180
      %s183 = sphi 0, %s182
      %s197 = sphi 0, %s183
      %s201 = sphi 0, %s201
      %s203 = sphi 0, %s201
      %s204 = sphi 0, %s203
      %s218 = sphi 0, %s204
      %s222 = sphi 0, %s222
      %s224 = sphi 0, %s222
      %s225 = sphi 0, %s224
      %s239 = sphi 0, %s225
      %s243 = sphi 0, %s243
      %s245 = sphi 0, %s243
      %s246 = sphi 0, %s245
      %s260 = sphi 0, %s246
      %s266 = sphi 0, %s268
      %s269 = sphi 0, %s266
      %s270 = sphi 0, %s269
      %s286 = sphi 0, %s270
    $region4: #{tpu_custom_call.1} parent=1 // loop_header_branch
      %23 = sbr.rel (%p21) target = $region8
    $region5: #{tpu_custom_call.1} parent=1 // loop_body
      %s25 = ssub.s32 %s20, 1
      %s26 = ssub.s32 %s20, 2
      %s27 = sadd.s32 %s20, 1
      %s28 = ssub.s32 %s20, %s27
      %p29 = scmp.eq.s32.totalorder %s28, 0
      %s31 = sadd.s32 %s30, 1
      %s32 = scalar_select %p29, %s30, %s31
      %p35 = pneg %p29
      %p36 = scmp.eq.s32.totalorder %s20, 1
      %p37 = por %p35, %p36
      %p38 = scmp.ne.s32.totalorder %s30, %s33
      %p39 = scmp.eq.s32.totalorder %s20, 0
      %p40 = por %p38, %p39
      %p41 = scmp.ne.s32.totalorder %s30, %s33
      %p42 = scmp.eq.s32.totalorder %s25, 1
      %p43 = por %p41, %p42
      %p44 = scmp.ne.s32.totalorder %s33, %s34
      %p45 = scmp.eq.s32.totalorder %s25, 0
      %p46 = por %p44, %p45
      %p47 = scmp.ne.s32.totalorder %s33, %s34
      %p48 = scmp.eq.s32.totalorder %s26, 1
      %p49 = por %p47, %p48
      %p51 = scmp.ne.s32.totalorder %s34, %s50
      %p52 = scmp.eq.s32.totalorder %s26, 0
      %p53 = por %p51, %p52
      %s55 = sadd.s32 %s54, 1
      %p58 = scmp.eq.s32.totalorder %s20, 1
      %p59 = scmp.ne.s32.totalorder %s54, %s56
      %p60 = scmp.eq.s32.totalorder %s20, 0
      %p61 = por %p59, %p60
      %p62 = scmp.ne.s32.totalorder %s54, %s56
      %p63 = scmp.eq.s32.totalorder %s25, 1
      %p64 = por %p62, %p63
      %p65 = scmp.ne.s32.totalorder %s56, %s57
      %p66 = scmp.eq.s32.totalorder %s25, 0
      %p67 = por %p65, %p66
      %p68 = scmp.ne.s32.totalorder %s56, %s57
      %p69 = scmp.eq.s32.totalorder %s26, 1
      %p70 = por %p68, %p69
      %p72 = scmp.ne.s32.totalorder %s57, %s71
      %p73 = scmp.eq.s32.totalorder %s26, 0
      %p74 = por %p72, %p73
      %s76 = sadd.s32 %s75, 1
      %p79 = scmp.eq.s32.totalorder %s20, 1
      %p80 = scmp.ne.s32.totalorder %s75, %s77
      %p81 = scmp.eq.s32.totalorder %s20, 0
      %p82 = por %p80, %p81
      %p83 = scmp.ne.s32.totalorder %s75, %s77
      %p84 = scmp.eq.s32.totalorder %s25, 1
      %p85 = por %p83, %p84
      %p86 = scmp.ne.s32.totalorder %s77, %s78
      %p87 = scmp.eq.s32.totalorder %s25, 0
      %p88 = por %p86, %p87
      %p89 = scmp.ne.s32.totalorder %s77, %s78
      %p90 = scmp.eq.s32.totalorder %s26, 1
      %p91 = por %p89, %p90
      %p93 = scmp.ne.s32.totalorder %s78, %s92
      %p94 = scmp.eq.s32.totalorder %s26, 0
      %p95 = por %p93, %p94
      %s97 = sadd.s32 %s96, 1
      %p100 = scmp.eq.s32.totalorder %s20, 1
      %p101 = scmp.ne.s32.totalorder %s96, %s98
      %p102 = scmp.eq.s32.totalorder %s20, 0
      %p103 = por %p101, %p102
      %p104 = scmp.ne.s32.totalorder %s96, %s98
      %p105 = scmp.eq.s32.totalorder %s25, 1
      %p106 = por %p104, %p105
      %p107 = scmp.ne.s32.totalorder %s98, %s99
      %p108 = scmp.eq.s32.totalorder %s25, 0
      %p109 = por %p107, %p108
      %p110 = scmp.ne.s32.totalorder %s98, %s99
      %p111 = scmp.eq.s32.totalorder %s26, 1
      %p112 = por %p110, %p111
      %p114 = scmp.ne.s32.totalorder %s99, %s113
      %p115 = scmp.eq.s32.totalorder %s26, 0
      %p116 = por %p114, %p115
      %s118 = sadd.s32 %s117, 1
      %p121 = scmp.eq.s32.totalorder %s20, 1
      %p122 = scmp.ne.s32.totalorder %s117, %s119
      %p123 = scmp.eq.s32.totalorder %s20, 0
      %p124 = por %p122, %p123
      %p125 = scmp.ne.s32.totalorder %s117, %s119
      %p126 = scmp.eq.s32.totalorder %s25, 1
      %p127 = por %p125, %p126
      %p128 = scmp.ne.s32.totalorder %s119, %s120
      %p129 = scmp.eq.s32.totalorder %s25, 0
      %p130 = por %p128, %p129
      %p131 = scmp.ne.s32.totalorder %s119, %s120
      %p132 = scmp.eq.s32.totalorder %s26, 1
      %p133 = por %p131, %p132
      %p135 = scmp.ne.s32.totalorder %s120, %s134
      %p136 = scmp.eq.s32.totalorder %s26, 0
      %p137 = por %p135, %p136
      %s139 = sadd.s32 %s138, 1
      %p142 = scmp.eq.s32.totalorder %s20, 1
      %p143 = scmp.ne.s32.totalorder %s138, %s140
      %p144 = scmp.eq.s32.totalorder %s20, 0
      %p145 = por %p143, %p144
      %p146 = scmp.ne.s32.totalorder %s138, %s140
      %p147 = scmp.eq.s32.totalorder %s25, 1
      %p148 = por %p146, %p147
      %p149 = scmp.ne.s32.totalorder %s140, %s141
      %p150 = scmp.eq.s32.totalorder %s25, 0
      %p151 = por %p149, %p150
      %p152 = scmp.ne.s32.totalorder %s140, %s141
      %p153 = scmp.eq.s32.totalorder %s26, 1
      %p154 = por %p152, %p153
      %p156 = scmp.ne.s32.totalorder %s141, %s155
      %p157 = scmp.eq.s32.totalorder %s26, 0
      %p158 = por %p156, %p157
      %s160 = sadd.s32 %s159, 1
      %p163 = scmp.eq.s32.totalorder %s20, 1
      %p164 = scmp.ne.s32.totalorder %s159, %s161
      %p165 = scmp.eq.s32.totalorder %s20, 0
      %p166 = por %p164, %p165
      %p167 = scmp.ne.s32.totalorder %s159, %s161
      %p168 = scmp.eq.s32.totalorder %s25, 1
      %p169 = por %p167, %p168
      %p170 = scmp.ne.s32.totalorder %s161, %s162
      %p171 = scmp.eq.s32.totalorder %s25, 0
      %p172 = por %p170, %p171
      %p173 = scmp.ne.s32.totalorder %s161, %s162
      %p174 = scmp.eq.s32.totalorder %s26, 1
      %p175 = por %p173, %p174
      %p177 = scmp.ne.s32.totalorder %s162, %s176
      %p178 = scmp.eq.s32.totalorder %s26, 0
      %p179 = por %p177, %p178
      %s181 = sadd.s32 %s180, 1
      %p184 = scmp.eq.s32.totalorder %s20, 1
      %p185 = scmp.ne.s32.totalorder %s180, %s182
      %p186 = scmp.eq.s32.totalorder %s20, 0
      %p187 = por %p185, %p186
      %p188 = scmp.ne.s32.totalorder %s180, %s182
      %p189 = scmp.eq.s32.totalorder %s25, 1
      %p190 = por %p188, %p189
      %p191 = scmp.ne.s32.totalorder %s182, %s183
      %p192 = scmp.eq.s32.totalorder %s25, 0
      %p193 = por %p191, %p192
      %p194 = scmp.ne.s32.totalorder %s182, %s183
      %p195 = scmp.eq.s32.totalorder %s26, 1
      %p196 = por %p194, %p195
      %p198 = scmp.ne.s32.totalorder %s183, %s197
      %p199 = scmp.eq.s32.totalorder %s26, 0
      %p200 = por %p198, %p199
      %s202 = sadd.s32 %s201, 1
      %p205 = scmp.eq.s32.totalorder %s20, 1
      %p206 = scmp.ne.s32.totalorder %s201, %s203
      %p207 = scmp.eq.s32.totalorder %s20, 0
      %p208 = por %p206, %p207
      %p209 = scmp.ne.s32.totalorder %s201, %s203
      %p210 = scmp.eq.s32.totalorder %s25, 1
      %p211 = por %p209, %p210
      %p212 = scmp.ne.s32.totalorder %s203, %s204
      %p213 = scmp.eq.s32.totalorder %s25, 0
      %p214 = por %p212, %p213
      %p215 = scmp.ne.s32.totalorder %s203, %s204
      %p216 = scmp.eq.s32.totalorder %s26, 1
      %p217 = por %p215, %p216
      %p219 = scmp.ne.s32.totalorder %s204, %s218
      %p220 = scmp.eq.s32.totalorder %s26, 0
      %p221 = por %p219, %p220
      %s223 = sadd.s32 %s222, 1
      %p226 = scmp.eq.s32.totalorder %s20, 1
      %p227 = scmp.ne.s32.totalorder %s222, %s224
      %p228 = scmp.eq.s32.totalorder %s20, 0
      %p229 = por %p227, %p228
      %p230 = scmp.ne.s32.totalorder %s222, %s224
      %p231 = scmp.eq.s32.totalorder %s25, 1
      %p232 = por %p230, %p231
      %p233 = scmp.ne.s32.totalorder %s224, %s225
      %p234 = scmp.eq.s32.totalorder %s25, 0
      %p235 = por %p233, %p234
      %p236 = scmp.ne.s32.totalorder %s224, %s225
      %p237 = scmp.eq.s32.totalorder %s26, 1
      %p238 = por %p236, %p237
      %p240 = scmp.ne.s32.totalorder %s225, %s239
      %p241 = scmp.eq.s32.totalorder %s26, 0
      %p242 = por %p240, %p241
      %s244 = sadd.s32 %s243, 1
      %p247 = scmp.eq.s32.totalorder %s20, 1
      %p248 = scmp.ne.s32.totalorder %s243, %s245
      %p249 = scmp.eq.s32.totalorder %s20, 0
      %p250 = por %p248, %p249
      %p251 = scmp.ne.s32.totalorder %s243, %s245
      %p252 = scmp.eq.s32.totalorder %s25, 1
      %p253 = por %p251, %p252
      %p254 = scmp.ne.s32.totalorder %s245, %s246
      %p255 = scmp.eq.s32.totalorder %s25, 0
      %p256 = por %p254, %p255
      %p257 = scmp.ne.s32.totalorder %s245, %s246
      %p258 = scmp.eq.s32.totalorder %s26, 1
      %p259 = por %p257, %p258
      %p261 = scmp.ne.s32.totalorder %s246, %s260
      %p262 = scmp.eq.s32.totalorder %s26, 0
      %p263 = por %p261, %p262
      %s264 = ssub.s32 %s20, %s27
      %p265 = scmp.eq.s32.totalorder %s264, 0
      %s267 = sadd.s32 %s266, 1
      %s268 = scalar_select %p265, %s266, %s267
      %p271 = pneg %p265
      %p272 = scmp.eq.s32.totalorder %s20, 1
      %p273 = por %p271, %p272
      %p274 = scmp.ne.s32.totalorder %s266, %s269
      %p275 = scmp.eq.s32.totalorder %s20, 0
      %p276 = por %p274, %p275
      %p277 = scmp.ne.s32.totalorder %s266, %s269
      %p278 = scmp.eq.s32.totalorder %s25, 1
      %p279 = por %p277, %p278
      %p280 = scmp.ne.s32.totalorder %s269, %s270
      %p281 = scmp.eq.s32.totalorder %s25, 0
      %p282 = por %p280, %p281
      %p283 = scmp.ne.s32.totalorder %s269, %s270
      %p284 = scmp.eq.s32.totalorder %s26, 1
      %p285 = por %p283, %p284
      %p287 = scmp.ne.s32.totalorder %s270, %s286
      %p288 = scmp.eq.s32.totalorder %s26, 0
      %p289 = por %p287, %p288
      %p290 = scmp.le.s32.totalorder 1, %s20
      %p291 = scmp.lt.s32.totalorder %s20, 3
      %p292 = pnand %p290, %p291
      %p293 = pneg %p292
      // Predicated region
      $region9: #{tpu_custom_call.1} parent=5 // pred_check
        _
      $region10: #{tpu_custom_call.1} parent=5 // pred_check_branch
        %295 = sbr.rel (%p292) target = $region12
      $region11: #{tpu_custom_call.1} parent=5 // pred_region
        %s296 = ssub.s32 %s20, 1
        // Predicated region
        $region13: #{tpu_custom_call.1} parent=11 // pred_check
          %p297 = pneg %p67
        $region14: #{tpu_custom_call.1} parent=11 // pred_check_branch
          %299 = sbr.rel (%p297) target = $region16
        $region15: #{tpu_custom_call.1} parent=11 // pred_region
          _
        $region16: #{tpu_custom_call.1} parent=11 // pred_fallthru
          _
        // Predicated region
        $region17: #{tpu_custom_call.1} parent=11 // pred_check
          %p300 = pneg %p88
        $region18: #{tpu_custom_call.1} parent=11 // pred_check_branch
          %302 = sbr.rel (%p300) target = $region20
        $region19: #{tpu_custom_call.1} parent=11 // pred_region
          _
        $region20: #{tpu_custom_call.1} parent=11 // pred_fallthru
          _
        // Predicated region
        $region21: #{tpu_custom_call.1} parent=11 // pred_check
          %p303 = pneg %p109
        $region22: #{tpu_custom_call.1} parent=11 // pred_check_branch
          %305 = sbr.rel (%p303) target = $region24
        $region23: #{tpu_custom_call.1} parent=11 // pred_region
          _
        $region24: #{tpu_custom_call.1} parent=11 // pred_fallthru
          _
        // Predicated region
        $region25: #{tpu_custom_call.1} parent=11 // pred_check
          %p306 = pneg %p130
        $region26: #{tpu_custom_call.1} parent=11 // pred_check_branch
          %308 = sbr.rel (%p306) target = $region28
        $region27: #{tpu_custom_call.1} parent=11 // pred_region
          _
        $region28: #{tpu_custom_call.1} parent=11 // pred_fallthru
          _
        // Predicated region
        $region29: #{tpu_custom_call.1} parent=11 // pred_check
          %p309 = pneg %p151
        $region30: #{tpu_custom_call.1} parent=11 // pred_check_branch
          %311 = sbr.rel (%p309) target = $region32
        $region31: #{tpu_custom_call.1} parent=11 // pred_region
          _
        $region32: #{tpu_custom_call.1} parent=11 // pred_fallthru
          _
        // Predicated region
        $region33: #{tpu_custom_call.1} parent=11 // pred_check
          %p312 = pneg %p172
        $region34: #{tpu_custom_call.1} parent=11 // pred_check_branch
          %314 = sbr.rel (%p312) target = $region36
        $region35: #{tpu_custom_call.1} parent=11 // pred_region
          _
        $region36: #{tpu_custom_call.1} parent=11 // pred_fallthru
          _
        // Predicated region
        $region37: #{tpu_custom_call.1} parent=11 // pred_check
          %p315 = pneg %p193
        $region38: #{tpu_custom_call.1} parent=11 // pred_check_branch
          %317 = sbr.rel (%p315) target = $region40
        $region39: #{tpu_custom_call.1} parent=11 // pred_region
          _
        $region40: #{tpu_custom_call.1} parent=11 // pred_fallthru
          _
        // Predicated region
        $region41: #{tpu_custom_call.1} parent=11 // pred_check
          %p318 = pneg %p214
        $region42: #{tpu_custom_call.1} parent=11 // pred_check_branch
          %320 = sbr.rel (%p318) target = $region44
        $region43: #{tpu_custom_call.1} parent=11 // pred_region
          _
        $region44: #{tpu_custom_call.1} parent=11 // pred_fallthru
          _
        // Predicated region
        $region45: #{tpu_custom_call.1} parent=11 // pred_check
          %p321 = pneg %p235
        $region46: #{tpu_custom_call.1} parent=11 // pred_check_branch
          %323 = sbr.rel (%p321) target = $region48
        $region47: #{tpu_custom_call.1} parent=11 // pred_region
          _
        $region48: #{tpu_custom_call.1} parent=11 // pred_fallthru
          _
        // Predicated region
        $region49: #{tpu_custom_call.1} parent=11 // pred_check
          %p324 = pneg %p256
        $region50: #{tpu_custom_call.1} parent=11 // pred_check_branch
          %326 = sbr.rel (%p324) target = $region52
        $region51: #{tpu_custom_call.1} parent=11 // pred_region
          _
        $region52: #{tpu_custom_call.1} parent=11 // pred_fallthru
          _
      $region12: #{tpu_custom_call.1} parent=5 // pred_fallthru
        _
      %p327 = scmp.lt.s32.totalorder %s20, 2
      // Predicated region
      $region53: #{tpu_custom_call.1} parent=5 // pred_check
        %p328 = pneg %p327
      $region54: #{tpu_custom_call.1} parent=5 // pred_check_branch
        %330 = sbr.rel (%p328) target = $region56
      $region55: #{tpu_custom_call.1} parent=5 // pred_region
        // Predicated region
        $region57: #{tpu_custom_call.1} parent=55 // pred_check
          %p331 = pneg %p40
        $region58: #{tpu_custom_call.1} parent=55 // pred_check_branch
          %333 = sbr.rel (%p331) target = $region60
        $region59: #{tpu_custom_call.1} parent=55 // pred_region
          %p334 = scmp.lt.s32.totalorder %s20, 1
          %s335 = scalar_select %p334, %s20, 1
          %s336 = smul.addr %s335, 8
          %s337 = smul.addr %s336, 8
          %s338 = scalar_lea.vmem %s0, %s337
        $region60: #{tpu_custom_call.1} parent=55 // pred_fallthru
          _
      $region56: #{tpu_custom_call.1} parent=5 // pred_fallthru
        _
      %p339 = scmp.le.s32.totalorder 1, %s20
      %p340 = scmp.lt.s32.totalorder %s20, 3
      %p341 = pnand %p339, %p340
      %p342 = pneg %p341
      // Predicated region
      $region61: #{tpu_custom_call.1} parent=5 // pred_check
        _
      $region62: #{tpu_custom_call.1} parent=5 // pred_check_branch
        %344 = sbr.rel (%p341) target = $region64
      $region63: #{tpu_custom_call.1} parent=5 // pred_region
        %s345 = ssub.s32 %s20, 1
        %p346 = scmp.lt.s32.totalorder %s25, 1
        %s347 = scalar_select %p346, %s25, 1
        %s348 = smul.addr %s347, 8
        %s349 = smul.addr %s348, 8
        %s350 = scalar_lea.vmem %s0, %s349
        %p351 = pneg %p46
        %p352 = pneg %p43
        %p353 = pneg %p67
        %p354 = pneg %p64
        %p355 = pneg %p88
        %p356 = pneg %p85
        %p357 = pneg %p109
        %p358 = pneg %p106
        %p359 = pneg %p130
        %p360 = pneg %p127
        %p361 = pneg %p151
        %p362 = pneg %p148
        %p363 = pneg %p172
        %p364 = pneg %p169
        %p365 = pneg %p193
        %p366 = pneg %p190
        %p367 = pneg %p214
        %p368 = pneg %p211
        %p369 = pneg %p235
        %p370 = pneg %p232
        %p371 = pneg %p256
        %p372 = pneg %p253
        %p373 = pneg %p282
        %p374 = pneg %p279
        %s375 = sand.u32 %s269, 1
        %s376 = scalar_lea.sflag [#allocation3], %s375
        %s377 = sand.u32 %s269, 1
        %s378 = smul.addr %s377, 64
        %s379 = scalar_lea.vmem [#allocation2], %s378
        %p380 = scmp.lt.s32.totalorder %s25, 1
        %s381 = scalar_select %p380, %s25, 1
        %s382 = smul.addr %s381, 8
        %s383 = smul.addr %s382, 8
        %s384 = scalar_lea.vmem %s0, %s383
        %v385 = vld [vmem:[%s384] sm:$0xff]
        %v386 = vld [vmem:[%s384 + $0x8] sm:$0xff]
        %v387 = vld [vmem:[%s384 + $0x10] sm:$0xff]
        %v388 = vld [vmem:[%s384 + $0x18] sm:$0xff]
        %v389 = vld [vmem:[%s384 + $0x20] sm:$0xff]
        %v390 = vld [vmem:[%s384 + $0x28] sm:$0xff]
        %v391 = vld [vmem:[%s384 + $0x30] sm:$0xff]
        %v392 = vld [vmem:[%s384 + $0x38] sm:$0xff]
        %v393 = vld [vmem:[%s1] sm:$0x1]
        %v394 = vld [vmem:[%s2] sm:$0x1]
        %395 = vadd.xlane.f32.xlu0 %v385
        %v396 = vpop.xlane.xlu0 %395
        %397 = vadd.xlane.f32.xlu0 %v386
        %v398 = vpop.xlane.xlu0 %397
        %399 = vadd.xlane.f32.xlu0 %v387
        %v400 = vpop.xlane.xlu0 %399
        %401 = vadd.xlane.f32.xlu0 %v388
        %v402 = vpop.xlane.xlu0 %401
        %403 = vadd.xlane.f32.xlu0 %v389
        %v404 = vpop.xlane.xlu0 %403
        %405 = vadd.xlane.f32.xlu0 %v390
        %v406 = vpop.xlane.xlu0 %405
        %407 = vadd.xlane.f32.xlu0 %v391
        %v408 = vpop.xlane.xlu0 %407
        %409 = vadd.xlane.f32.xlu0 %v392
        %v410 = vpop.xlane.xlu0 %409
        %v411 = vrcp.pop 128.0
        %v412 = vmul.f32 128.0, %v411
        %v413 = vsub.f32 1.0, %v412
        %v414 = vmul.f32 %v411, %v413
        %v415 = vadd.f32 %v411, %v414
        %vm416 = vweird.f32 %v411
        %v417 = vsel %vm416, %v411, %v415
        %v418 = vmul.f32 %v396, %v417
        %v419 = vmul.f32 %v398, %v417
        %v420 = vmul.f32 %v400, %v417
        %v421 = vmul.f32 %v402, %v417
        %v422 = vmul.f32 %v404, %v417
        %v423 = vmul.f32 %v406, %v417
        %v424 = vmul.f32 %v408, %v417
        %v425 = vmul.f32 %v410, %v417
        %v426 = vsub.f32 %v385, %v418
        %v427 = vsub.f32 %v386, %v419
        %v428 = vsub.f32 %v387, %v420
        %v429 = vsub.f32 %v388, %v421
        %v430 = vsub.f32 %v389, %v422
        %v431 = vsub.f32 %v390, %v423
        %v432 = vsub.f32 %v391, %v424
        %v433 = vsub.f32 %v392, %v425
        %v434 = vmul.f32 %v426, %v426
        %v435 = vmul.f32 %v427, %v427
        %v436 = vmul.f32 %v428, %v428
        %v437 = vmul.f32 %v429, %v429
        %v438 = vmul.f32 %v430, %v430
        %v439 = vmul.f32 %v431, %v431
        %v440 = vmul.f32 %v432, %v432
        %v441 = vmul.f32 %v433, %v433
        %442 = vadd.xlane.f32.xlu0 %v434
        %v443 = vpop.xlane.xlu0 %442
        %444 = vadd.xlane.f32.xlu0 %v435
        %v445 = vpop.xlane.xlu0 %444
        %446 = vadd.xlane.f32.xlu0 %v436
        %v447 = vpop.xlane.xlu0 %446
        %448 = vadd.xlane.f32.xlu0 %v437
        %v449 = vpop.xlane.xlu0 %448
        %450 = vadd.xlane.f32.xlu0 %v438
        %v451 = vpop.xlane.xlu0 %450
        %452 = vadd.xlane.f32.xlu0 %v439
        %v453 = vpop.xlane.xlu0 %452
        %454 = vadd.xlane.f32.xlu0 %v440
        %v455 = vpop.xlane.xlu0 %454
        %456 = vadd.xlane.f32.xlu0 %v441
        %v457 = vpop.xlane.xlu0 %456
        %v458 = vmul.f32 %v443, %v417
        %v459 = vmul.f32 %v445, %v417
        %v460 = vmul.f32 %v447, %v417
        %v461 = vmul.f32 %v449, %v417
        %v462 = vmul.f32 %v451, %v417
        %v463 = vmul.f32 %v453, %v417
        %v464 = vmul.f32 %v455, %v417
        %v465 = vmul.f32 %v457, %v417
        %v466 = vadd.f32 %v458, 1e-05
        %v467 = vadd.f32 %v459, 1e-05
        %v468 = vadd.f32 %v460, 1e-05
        %v469 = vadd.f32 %v461, 1e-05
        %v470 = vadd.f32 %v462, 1e-05
        %v471 = vadd.f32 %v463, 1e-05
        %v472 = vadd.f32 %v464, 1e-05
        %v473 = vadd.f32 %v465, 1e-05
        %v474 = vrsqrt.pop %v466
        %v475 = vmul.f32 %v474, %v466
        %v476 = vmul.f32 %v475, %v474
        %v477 = vmul.f32 0.5, %v476
        %v478 = vsub.f32 1.5, %v477
        %v479 = vmul.f32 %v474, %v478
        %vm480 = vweird.f32 %v466
        %vm481 = vweird.f32 %v474
        %vm482 = vmor %vm480, %vm481
        %v483 = vsel %vm482, %v474, %v479
        %v484 = vrsqrt.pop %v467
        %v485 = vmul.f32 %v484, %v467
        %v486 = vmul.f32 %v485, %v484
        %v487 = vmul.f32 0.5, %v486
        %v488 = vsub.f32 1.5, %v487
        %v489 = vmul.f32 %v484, %v488
        %vm490 = vweird.f32 %v467
        %vm491 = vweird.f32 %v484
        %vm492 = vmor %vm490, %vm491
        %v493 = vsel %vm492, %v484, %v489
        %v494 = vrsqrt.pop %v468
        %v495 = vmul.f32 %v494, %v468
        %v496 = vmul.f32 %v495, %v494
        %v497 = vmul.f32 0.5, %v496
        %v498 = vsub.f32 1.5, %v497
        %v499 = vmul.f32 %v494, %v498
        %vm500 = vweird.f32 %v468
        %vm501 = vweird.f32 %v494
        %vm502 = vmor %vm500, %vm501
        %v503 = vsel %vm502, %v494, %v499
        %v504 = vrsqrt.pop %v469
        %v505 = vmul.f32 %v504, %v469
        %v506 = vmul.f32 %v505, %v504
        %v507 = vmul.f32 0.5, %v506
        %v508 = vsub.f32 1.5, %v507
        %v509 = vmul.f32 %v504, %v508
        %vm510 = vweird.f32 %v469
        %vm511 = vweird.f32 %v504
        %vm512 = vmor %vm510, %vm511
        %v513 = vsel %vm512, %v504, %v509
        %v514 = vrsqrt.pop %v470
        %v515 = vmul.f32 %v514, %v470
        %v516 = vmul.f32 %v515, %v514
        %v517 = vmul.f32 0.5, %v516
        %v518 = vsub.f32 1.5, %v517
        %v519 = vmul.f32 %v514, %v518
        %vm520 = vweird.f32 %v470
        %vm521 = vweird.f32 %v514
        %vm522 = vmor %vm520, %vm521
        %v523 = vsel %vm522, %v514, %v519
        %v524 = vrsqrt.pop %v471
        %v525 = vmul.f32 %v524, %v471
        %v526 = vmul.f32 %v525, %v524
        %v527 = vmul.f32 0.5, %v526
        %v528 = vsub.f32 1.5, %v527
        %v529 = vmul.f32 %v524, %v528
        %vm530 = vweird.f32 %v471
        %vm531 = vweird.f32 %v524
        %vm532 = vmor %vm530, %vm531
        %v533 = vsel %vm532, %v524, %v529
        %v534 = vrsqrt.pop %v472
        %v535 = vmul.f32 %v534, %v472
        %v536 = vmul.f32 %v535, %v534
        %v537 = vmul.f32 0.5, %v536
        %v538 = vsub.f32 1.5, %v537
        %v539 = vmul.f32 %v534, %v538
        %vm540 = vweird.f32 %v472
        %vm541 = vweird.f32 %v534
        %vm542 = vmor %vm540, %vm541
        %v543 = vsel %vm542, %v534, %v539
        %v544 = vrsqrt.pop %v473
        %v545 = vmul.f32 %v544, %v473
        %v546 = vmul.f32 %v545, %v544
        %v547 = vmul.f32 0.5, %v546
        %v548 = vsub.f32 1.5, %v547
        %v549 = vmul.f32 %v544, %v548
        %vm550 = vweird.f32 %v473
        %vm551 = vweird.f32 %v544
        %vm552 = vmor %vm550, %vm551
        %v553 = vsel %vm552, %v544, %v549
        %v554 = vmul.f32 %v426, %v483
        %v555 = vmul.f32 %v427, %v493
        %v556 = vmul.f32 %v428, %v503
        %v557 = vmul.f32 %v429, %v513
        %v558 = vmul.f32 %v430, %v523
        %v559 = vmul.f32 %v431, %v533
        %v560 = vmul.f32 %v432, %v543
        %v561 = vmul.f32 %v433, %v553
        %v563 = vperm.slane %v393, 0
        %v565 = vmul.f32 %v554, %v563
        %v566 = vmul.f32 %v555, %v563
        %v567 = vmul.f32 %v556, %v563
        %v568 = vmul.f32 %v557, %v563
        %v569 = vmul.f32 %v558, %v563
        %v570 = vmul.f32 %v559, %v563
        %v571 = vmul.f32 %v560, %v563
        %v572 = vmul.f32 %v561, %v563
        %v574 = vperm.slane %v394, 0
        %v576 = vadd.f32 %v565, %v574
        %v577 = vadd.f32 %v566, %v574
        %v578 = vadd.f32 %v567, %v574
        %v579 = vadd.f32 %v568, %v574
        %v580 = vadd.f32 %v569, %v574
        %v581 = vadd.f32 %v570, %v574
        %v582 = vadd.f32 %v571, %v574
        %v583 = vadd.f32 %v572, %v574
        %v584 = vld [vmem:[%s3] sm:$0xff]
        %v585 = vld [vmem:[%s3 + $0x8] sm:$0xff]
        %v586 = vld [vmem:[%s3 + $0x10] sm:$0xff]
        %v587 = vld [vmem:[%s3 + $0x18] sm:$0xff]
        %v588 = vld [vmem:[%s3 + $0x20] sm:$0xff]
        %v589 = vld [vmem:[%s3 + $0x28] sm:$0xff]
        %v590 = vld [vmem:[%s3 + $0x30] sm:$0xff]
        %v591 = vld [vmem:[%s3 + $0x38] sm:$0xff]
        %v592 = vld [vmem:[%s3 + $0x40] sm:$0xff]
        %v593 = vld [vmem:[%s3 + $0x48] sm:$0xff]
        %v594 = vld [vmem:[%s3 + $0x50] sm:$0xff]
        %v595 = vld [vmem:[%s3 + $0x58] sm:$0xff]
        %v596 = vld [vmem:[%s3 + $0x60] sm:$0xff]
        %v597 = vld [vmem:[%s3 + $0x68] sm:$0xff]
        %v598 = vld [vmem:[%s3 + $0x70] sm:$0xff]
        %v599 = vld [vmem:[%s3 + $0x78] sm:$0xff]
        %600 = vmatpush.msra.mxu0 %v599
        %601 = vmatpush.msra.mxu0 %v598
        %602 = vmatpush.msra.mxu0 %v597
        %603 = vmatpush.msra.mxu0 %v596
        %604 = vmatpush.msra.mxu0 %v595
        %605 = vmatpush.msra.mxu0 %v594
        %606 = vmatpush.msra.mxu0 %v593
        %607 = vmatpush.msra.mxu0 %v592
        %608 = vmatpush.msra.mxu0 %v591
        %609 = vmatpush.msra.mxu0 %v590
        %610 = vmatpush.msra.mxu0 %v589
        %611 = vmatpush.msra.mxu0 %v588
        %612 = vmatpush.msra.mxu0 %v587
        %613 = vmatpush.msra.mxu0 %v586
        %614 = vmatpush.msra.mxu0 %v585
        %615 = vmatpush.msra.mxu0 %v584
        %616 = vmatmul.f32.gmra.mxu0 %v576
        %v617 = vpop.f32.mrf.mxu0
        %v618 = vadd.f32 0.0, %v617
        %619 = vmatmul.f32.gmra.mxu0 %v577
        %v620 = vpop.f32.mrf.mxu0
        %v621 = vadd.f32 0.0, %v620
        %622 = vmatmul.f32.gmra.mxu0 %v578
        %v623 = vpop.f32.mrf.mxu0
        %v624 = vadd.f32 0.0, %v623
        %625 = vmatmul.f32.gmra.mxu0 %v579
        %v626 = vpop.f32.mrf.mxu0
        %v627 = vadd.f32 0.0, %v626
        %628 = vmatmul.f32.gmra.mxu0 %v580
        %v629 = vpop.f32.mrf.mxu0
        %v630 = vadd.f32 0.0, %v629
        %631 = vmatmul.f32.gmra.mxu0 %v581
        %v632 = vpop.f32.mrf.mxu0
        %v633 = vadd.f32 0.0, %v632
        %634 = vmatmul.f32.gmra.mxu0 %v582
        %v635 = vpop.f32.mrf.mxu0
        %v636 = vadd.f32 0.0, %v635
        %637 = vmatmul.f32.gmra.mxu0 %v583
        %v638 = vpop.f32.mrf.mxu0
        %v639 = vadd.f32 0.0, %v638
        %640 = vdwg.mxu0
        %v641 = vsub.f32 0.0, %v618
        %v642 = vsub.f32 0.0, %v621
        %v643 = vsub.f32 0.0, %v624
        %v644 = vsub.f32 0.0, %v627
        %v645 = vsub.f32 0.0, %v630
        %v646 = vsub.f32 0.0, %v633
        %v647 = vsub.f32 0.0, %v636
        %v648 = vsub.f32 0.0, %v639
        %v649 = vmul.f32 %v641, 1.442695
        %v650 = vpow.pop %v649
        %v651 = vmul.f32 %v642, 1.442695
        %v652 = vpow.pop %v651
        %v653 = vmul.f32 %v643, 1.442695
        %v654 = vpow.pop %v653
        %v655 = vmul.f32 %v644, 1.442695
        %v656 = vpow.pop %v655
        %v657 = vmul.f32 %v645, 1.442695
        %v658 = vpow.pop %v657
        %v659 = vmul.f32 %v646, 1.442695
        %v660 = vpow.pop %v659
        %v661 = vmul.f32 %v647, 1.442695
        %v662 = vpow.pop %v661
        %v663 = vmul.f32 %v648, 1.442695
        %v664 = vpow.pop %v663
        %v665 = vadd.f32 %v650, 1.0
        %v666 = vadd.f32 %v652, 1.0
        %v667 = vadd.f32 %v654, 1.0
        %v668 = vadd.f32 %v656, 1.0
        %v669 = vadd.f32 %v658, 1.0
        %v670 = vadd.f32 %v660, 1.0
        %v671 = vadd.f32 %v662, 1.0
        %v672 = vadd.f32 %v664, 1.0
        %v673 = vrcp.pop %v665
        %v674 = vmul.f32 %v665, %v673
        %v675 = vsub.f32 1.0, %v674
        %v676 = vmul.f32 %v673, %v675
        %v677 = vadd.f32 %v673, %v676
        %vm678 = vweird.f32 %v665
        %vm679 = vweird.f32 %v673
        %vm680 = vmor %vm678, %vm679
        %v681 = vsel %vm680, %v673, %v677
        %v682 = vand.u32 2147483647, %v665
        %vm683 = vcmp.eq.f32.partialorder %v682, 8.507059e+37
        %v684 = vand.u32 %v665, 2147483648
        %v685 = vor.u32 1.1754944e-38, %v684
        %v686 = vsel %vm683, %v685, %v681
        %v687 = vmul.f32 1.0, %v686
        %v688 = vrcp.pop %v666
        %v689 = vmul.f32 %v666, %v688
        %v690 = vsub.f32 1.0, %v689
        %v691 = vmul.f32 %v688, %v690
        %v692 = vadd.f32 %v688, %v691
        %vm693 = vweird.f32 %v666
        %vm694 = vweird.f32 %v688
        %vm695 = vmor %vm693, %vm694
        %v696 = vsel %vm695, %v688, %v692
        %v697 = vand.u32 2147483647, %v666
        %vm698 = vcmp.eq.f32.partialorder %v697, 8.507059e+37
        %v699 = vand.u32 %v666, 2147483648
        %v700 = vor.u32 1.1754944e-38, %v699
        %v701 = vsel %vm698, %v700, %v696
        %v702 = vmul.f32 1.0, %v701
        %v703 = vrcp.pop %v667
        %v704 = vmul.f32 %v667, %v703
        %v705 = vsub.f32 1.0, %v704
        %v706 = vmul.f32 %v703, %v705
        %v707 = vadd.f32 %v703, %v706
        %vm708 = vweird.f32 %v667
        %vm709 = vweird.f32 %v703
        %vm710 = vmor %vm708, %vm709
        %v711 = vsel %vm710, %v703, %v707
        %v712 = vand.u32 2147483647, %v667
        %vm713 = vcmp.eq.f32.partialorder %v712, 8.507059e+37
        %v714 = vand.u32 %v667, 2147483648
        %v715 = vor.u32 1.1754944e-38, %v714
        %v716 = vsel %vm713, %v715, %v711
        %v717 = vmul.f32 1.0, %v716
        %v718 = vrcp.pop %v668
        %v719 = vmul.f32 %v668, %v718
        %v720 = vsub.f32 1.0, %v719
        %v721 = vmul.f32 %v718, %v720
        %v722 = vadd.f32 %v718, %v721
        %vm723 = vweird.f32 %v668
        %vm724 = vweird.f32 %v718
        %vm725 = vmor %vm723, %vm724
        %v726 = vsel %vm725, %v718, %v722
        %v727 = vand.u32 2147483647, %v668
        %vm728 = vcmp.eq.f32.partialorder %v727, 8.507059e+37
        %v729 = vand.u32 %v668, 2147483648
        %v730 = vor.u32 1.1754944e-38, %v729
        %v731 = vsel %vm728, %v730, %v726
        %v732 = vmul.f32 1.0, %v731
        %v733 = vrcp.pop %v669
        %v734 = vmul.f32 %v669, %v733
        %v735 = vsub.f32 1.0, %v734
        %v736 = vmul.f32 %v733, %v735
        %v737 = vadd.f32 %v733, %v736
        %vm738 = vweird.f32 %v669
        %vm739 = vweird.f32 %v733
        %vm740 = vmor %vm738, %vm739
        %v741 = vsel %vm740, %v733, %v737
        %v742 = vand.u32 2147483647, %v669
        %vm743 = vcmp.eq.f32.partialorder %v742, 8.507059e+37
        %v744 = vand.u32 %v669, 2147483648
        %v745 = vor.u32 1.1754944e-38, %v744
        %v746 = vsel %vm743, %v745, %v741
        %v747 = vmul.f32 1.0, %v746
        %v748 = vrcp.pop %v670
        %v749 = vmul.f32 %v670, %v748
        %v750 = vsub.f32 1.0, %v749
        %v751 = vmul.f32 %v748, %v750
        %v752 = vadd.f32 %v748, %v751
        %vm753 = vweird.f32 %v670
        %vm754 = vweird.f32 %v748
        %vm755 = vmor %vm753, %vm754
        %v756 = vsel %vm755, %v748, %v752
        %v757 = vand.u32 2147483647, %v670
        %vm758 = vcmp.eq.f32.partialorder %v757, 8.507059e+37
        %v759 = vand.u32 %v670, 2147483648
        %v760 = vor.u32 1.1754944e-38, %v759
        %v761 = vsel %vm758, %v760, %v756
        %v762 = vmul.f32 1.0, %v761
        %v763 = vrcp.pop %v671
        %v764 = vmul.f32 %v671, %v763
        %v765 = vsub.f32 1.0, %v764
        %v766 = vmul.f32 %v763, %v765
        %v767 = vadd.f32 %v763, %v766
        %vm768 = vweird.f32 %v671
        %vm769 = vweird.f32 %v763
        %vm770 = vmor %vm768, %vm769
        %v771 = vsel %vm770, %v763, %v767
        %v772 = vand.u32 2147483647, %v671
        %vm773 = vcmp.eq.f32.partialorder %v772, 8.507059e+37
        %v774 = vand.u32 %v671, 2147483648
        %v775 = vor.u32 1.1754944e-38, %v774
        %v776 = vsel %vm773, %v775, %v771
        %v777 = vmul.f32 1.0, %v776
        %v778 = vrcp.pop %v672
        %v779 = vmul.f32 %v672, %v778
        %v780 = vsub.f32 1.0, %v779
        %v781 = vmul.f32 %v778, %v780
        %v782 = vadd.f32 %v778, %v781
        %vm783 = vweird.f32 %v672
        %vm784 = vweird.f32 %v778
        %vm785 = vmor %vm783, %vm784
        %v786 = vsel %vm785, %v778, %v782
        %v787 = vand.u32 2147483647, %v672
        %vm788 = vcmp.eq.f32.partialorder %v787, 8.507059e+37
        %v789 = vand.u32 %v672, 2147483648
        %v790 = vor.u32 1.1754944e-38, %v789
        %v791 = vsel %vm788, %v790, %v786
        %v792 = vmul.f32 1.0, %v791
        %v793 = vld [vmem:[%s5] sm:$0xff]
        %v794 = vld [vmem:[%s5 + $0x8] sm:$0xff]
        %v795 = vld [vmem:[%s5 + $0x10] sm:$0xff]
        %v796 = vld [vmem:[%s5 + $0x18] sm:$0xff]
        %v797 = vld [vmem:[%s5 + $0x20] sm:$0xff]
        %v798 = vld [vmem:[%s5 + $0x28] sm:$0xff]
        %v799 = vld [vmem:[%s5 + $0x30] sm:$0xff]
        %v800 = vld [vmem:[%s5 + $0x38] sm:$0xff]
        %v801 = vld [vmem:[%s5 + $0x40] sm:$0xff]
        %v802 = vld [vmem:[%s5 + $0x48] sm:$0xff]
        %v803 = vld [vmem:[%s5 + $0x50] sm:$0xff]
        %v804 = vld [vmem:[%s5 + $0x58] sm:$0xff]
        %v805 = vld [vmem:[%s5 + $0x60] sm:$0xff]
        %v806 = vld [vmem:[%s5 + $0x68] sm:$0xff]
        %v807 = vld [vmem:[%s5 + $0x70] sm:$0xff]
        %v808 = vld [vmem:[%s5 + $0x78] sm:$0xff]
        %809 = vmatpush.msra.mxu0 %v808
        %810 = vmatpush.msra.mxu0 %v807
        %811 = vmatpush.msra.mxu0 %v806
        %812 = vmatpush.msra.mxu0 %v805
        %813 = vmatpush.msra.mxu0 %v804
        %814 = vmatpush.msra.mxu0 %v803
        %815 = vmatpush.msra.mxu0 %v802
        %816 = vmatpush.msra.mxu0 %v801
        %817 = vmatpush.msra.mxu0 %v800
        %818 = vmatpush.msra.mxu0 %v799
        %819 = vmatpush.msra.mxu0 %v798
        %820 = vmatpush.msra.mxu0 %v797
        %821 = vmatpush.msra.mxu0 %v796
        %822 = vmatpush.msra.mxu0 %v795
        %823 = vmatpush.msra.mxu0 %v794
        %824 = vmatpush.msra.mxu0 %v793
        %825 = vmatmul.f32.gmra.mxu0 %v576
        %v826 = vpop.f32.mrf.mxu0
        %v827 = vadd.f32 0.0, %v826
        %828 = vmatmul.f32.gmra.mxu0 %v577
        %v829 = vpop.f32.mrf.mxu0
        %v830 = vadd.f32 0.0, %v829
        %831 = vmatmul.f32.gmra.mxu0 %v578
        %v832 = vpop.f32.mrf.mxu0
        %v833 = vadd.f32 0.0, %v832
        %834 = vmatmul.f32.gmra.mxu0 %v579
        %v835 = vpop.f32.mrf.mxu0
        %v836 = vadd.f32 0.0, %v835
        %837 = vmatmul.f32.gmra.mxu0 %v580
        %v838 = vpop.f32.mrf.mxu0
        %v839 = vadd.f32 0.0, %v838
        %840 = vmatmul.f32.gmra.mxu0 %v581
        %v841 = vpop.f32.mrf.mxu0
        %v842 = vadd.f32 0.0, %v841
        %843 = vmatmul.f32.gmra.mxu0 %v582
        %v844 = vpop.f32.mrf.mxu0
        %v845 = vadd.f32 0.0, %v844
        %846 = vmatmul.f32.gmra.mxu0 %v583
        %v847 = vpop.f32.mrf.mxu0
        %v848 = vadd.f32 0.0, %v847
        %849 = vdwg.mxu0
        %v850 = vmul.f32 %v687, %v827
        %v851 = vmul.f32 %v702, %v830
        %v852 = vmul.f32 %v717, %v833
        %v853 = vmul.f32 %v732, %v836
        %v854 = vmul.f32 %v747, %v839
        %v855 = vmul.f32 %v762, %v842
        %v856 = vmul.f32 %v777, %v845
        %v857 = vmul.f32 %v792, %v848
        %v858 = vld [vmem:[%s4] sm:$0xff]
        %v859 = vld [vmem:[%s4 + $0x8] sm:$0xff]
        %v860 = vld [vmem:[%s4 + $0x10] sm:$0xff]
        %v861 = vld [vmem:[%s4 + $0x18] sm:$0xff]
        %v862 = vld [vmem:[%s4 + $0x20] sm:$0xff]
        %v863 = vld [vmem:[%s4 + $0x28] sm:$0xff]
        %v864 = vld [vmem:[%s4 + $0x30] sm:$0xff]
        %v865 = vld [vmem:[%s4 + $0x38] sm:$0xff]
        %v866 = vld [vmem:[%s4 + $0x40] sm:$0xff]
        %v867 = vld [vmem:[%s4 + $0x48] sm:$0xff]
        %v868 = vld [vmem:[%s4 + $0x50] sm:$0xff]
        %v869 = vld [vmem:[%s4 + $0x58] sm:$0xff]
        %v870 = vld [vmem:[%s4 + $0x60] sm:$0xff]
        %v871 = vld [vmem:[%s4 + $0x68] sm:$0xff]
        %v872 = vld [vmem:[%s4 + $0x70] sm:$0xff]
        %v873 = vld [vmem:[%s4 + $0x78] sm:$0xff]
        %874 = vmatpush.msra.mxu0 %v873
        %875 = vmatpush.msra.mxu0 %v872
        %876 = vmatpush.msra.mxu0 %v871
        %877 = vmatpush.msra.mxu0 %v870
        %878 = vmatpush.msra.mxu0 %v869
        %879 = vmatpush.msra.mxu0 %v868
        %880 = vmatpush.msra.mxu0 %v867
        %881 = vmatpush.msra.mxu0 %v866
        %882 = vmatpush.msra.mxu0 %v865
        %883 = vmatpush.msra.mxu0 %v864
        %884 = vmatpush.msra.mxu0 %v863
        %885 = vmatpush.msra.mxu0 %v862
        %886 = vmatpush.msra.mxu0 %v861
        %887 = vmatpush.msra.mxu0 %v860
        %888 = vmatpush.msra.mxu0 %v859
        %889 = vmatpush.msra.mxu0 %v858
        %890 = vmatmul.f32.gmra.mxu0 %v576
        %v891 = vpop.f32.mrf.mxu0
        %v892 = vadd.f32 0.0, %v891
        %893 = vmatmul.f32.gmra.mxu0 %v577
        %v894 = vpop.f32.mrf.mxu0
        %v895 = vadd.f32 0.0, %v894
        %896 = vmatmul.f32.gmra.mxu0 %v578
        %v897 = vpop.f32.mrf.mxu0
        %v898 = vadd.f32 0.0, %v897
        %899 = vmatmul.f32.gmra.mxu0 %v579
        %v900 = vpop.f32.mrf.mxu0
        %v901 = vadd.f32 0.0, %v900
        %902 = vmatmul.f32.gmra.mxu0 %v580
        %v903 = vpop.f32.mrf.mxu0
        %v904 = vadd.f32 0.0, %v903
        %905 = vmatmul.f32.gmra.mxu0 %v581
        %v906 = vpop.f32.mrf.mxu0
        %v907 = vadd.f32 0.0, %v906
        %908 = vmatmul.f32.gmra.mxu0 %v582
        %v909 = vpop.f32.mrf.mxu0
        %v910 = vadd.f32 0.0, %v909
        %911 = vmatmul.f32.gmra.mxu0 %v583
        %v912 = vpop.f32.mrf.mxu0
        %v913 = vadd.f32 0.0, %v912
        %914 = vdwg.mxu0
        %v915 = vsub.f32 0.0, %v892
        %v916 = vsub.f32 0.0, %v895
        %v917 = vsub.f32 0.0, %v898
        %v918 = vsub.f32 0.0, %v901
        %v919 = vsub.f32 0.0, %v904
        %v920 = vsub.f32 0.0, %v907
        %v921 = vsub.f32 0.0, %v910
        %v922 = vsub.f32 0.0, %v913
        %v923 = vmul.f32 %v915, 1.442695
        %v924 = vpow.pop %v923
        %v925 = vmul.f32 %v916, 1.442695
        %v926 = vpow.pop %v925
        %v927 = vmul.f32 %v917, 1.442695
        %v928 = vpow.pop %v927
        %v929 = vmul.f32 %v918, 1.442695
        %v930 = vpow.pop %v929
        %v931 = vmul.f32 %v919, 1.442695
        %v932 = vpow.pop %v931
        %v933 = vmul.f32 %v920, 1.442695
        %v934 = vpow.pop %v933
        %v935 = vmul.f32 %v921, 1.442695
        %v936 = vpow.pop %v935
        %v937 = vmul.f32 %v922, 1.442695
        %v938 = vpow.pop %v937
        %v939 = vadd.f32 %v924, 1.0
        %v940 = vadd.f32 %v926, 1.0
        %v941 = vadd.f32 %v928, 1.0
        %v942 = vadd.f32 %v930, 1.0
        %v943 = vadd.f32 %v932, 1.0
        %v944 = vadd.f32 %v934, 1.0
        %v945 = vadd.f32 %v936, 1.0
        %v946 = vadd.f32 %v938, 1.0
        %v947 = vrcp.pop %v939
        %v948 = vmul.f32 %v939, %v947
        %v949 = vsub.f32 1.0, %v948
        %v950 = vmul.f32 %v947, %v949
        %v951 = vadd.f32 %v947, %v950
        %vm952 = vweird.f32 %v939
        %vm953 = vweird.f32 %v947
        %vm954 = vmor %vm952, %vm953
        %v955 = vsel %vm954, %v947, %v951
        %v956 = vand.u32 2147483647, %v939
        %vm957 = vcmp.eq.f32.partialorder %v956, 8.507059e+37
        %v958 = vand.u32 %v939, 2147483648
        %v959 = vor.u32 1.1754944e-38, %v958
        %v960 = vsel %vm957, %v959, %v955
        %v961 = vmul.f32 1.0, %v960
        %v962 = vrcp.pop %v940
        %v963 = vmul.f32 %v940, %v962
        %v964 = vsub.f32 1.0, %v963
        %v965 = vmul.f32 %v962, %v964
        %v966 = vadd.f32 %v962, %v965
        %vm967 = vweird.f32 %v940
        %vm968 = vweird.f32 %v962
        %vm969 = vmor %vm967, %vm968
        %v970 = vsel %vm969, %v962, %v966
        %v971 = vand.u32 2147483647, %v940
        %vm972 = vcmp.eq.f32.partialorder %v971, 8.507059e+37
        %v973 = vand.u32 %v940, 2147483648
        %v974 = vor.u32 1.1754944e-38, %v973
        %v975 = vsel %vm972, %v974, %v970
        %v976 = vmul.f32 1.0, %v975
        %v977 = vrcp.pop %v941
        %v978 = vmul.f32 %v941, %v977
        %v979 = vsub.f32 1.0, %v978
        %v980 = vmul.f32 %v977, %v979
        %v981 = vadd.f32 %v977, %v980
        %vm982 = vweird.f32 %v941
        %vm983 = vweird.f32 %v977
        %vm984 = vmor %vm982, %vm983
        %v985 = vsel %vm984, %v977, %v981
        %v986 = vand.u32 2147483647, %v941
        %vm987 = vcmp.eq.f32.partialorder %v986, 8.507059e+37
        %v988 = vand.u32 %v941, 2147483648
        %v989 = vor.u32 1.1754944e-38, %v988
        %v990 = vsel %vm987, %v989, %v985
        %v991 = vmul.f32 1.0, %v990
        %v992 = vrcp.pop %v942
        %v993 = vmul.f32 %v942, %v992
        %v994 = vsub.f32 1.0, %v993
        %v995 = vmul.f32 %v992, %v994
        %v996 = vadd.f32 %v992, %v995
        %vm997 = vweird.f32 %v942
        %vm998 = vweird.f32 %v992
        %vm999 = vmor %vm997, %vm998
        %v1000 = vsel %vm999, %v992, %v996
        %v1001 = vand.u32 2147483647, %v942
        %vm1002 = vcmp.eq.f32.partialorder %v1001, 8.507059e+37
        %v1003 = vand.u32 %v942, 2147483648
        %v1004 = vor.u32 1.1754944e-38, %v1003
        %v1005 = vsel %vm1002, %v1004, %v1000
        %v1006 = vmul.f32 1.0, %v1005
        %v1007 = vrcp.pop %v943
        %v1008 = vmul.f32 %v943, %v1007
        %v1009 = vsub.f32 1.0, %v1008
        %v1010 = vmul.f32 %v1007, %v1009
        %v1011 = vadd.f32 %v1007, %v1010
        %vm1012 = vweird.f32 %v943
        %vm1013 = vweird.f32 %v1007
        %vm1014 = vmor %vm1012, %vm1013
        %v1015 = vsel %vm1014, %v1007, %v1011
        %v1016 = vand.u32 2147483647, %v943
        %vm1017 = vcmp.eq.f32.partialorder %v1016, 8.507059e+37
        %v1018 = vand.u32 %v943, 2147483648
        %v1019 = vor.u32 1.1754944e-38, %v1018
        %v1020 = vsel %vm1017, %v1019, %v1015
        %v1021 = vmul.f32 1.0, %v1020
        %v1022 = vrcp.pop %v944
        %v1023 = vmul.f32 %v944, %v1022
        %v1024 = vsub.f32 1.0, %v1023
        %v1025 = vmul.f32 %v1022, %v1024
        %v1026 = vadd.f32 %v1022, %v1025
        %vm1027 = vweird.f32 %v944
        %vm1028 = vweird.f32 %v1022
        %vm1029 = vmor %vm1027, %vm1028
        %v1030 = vsel %vm1029, %v1022, %v1026
        %v1031 = vand.u32 2147483647, %v944
        %vm1032 = vcmp.eq.f32.partialorder %v1031, 8.507059e+37
        %v1033 = vand.u32 %v944, 2147483648
        %v1034 = vor.u32 1.1754944e-38, %v1033
        %v1035 = vsel %vm1032, %v1034, %v1030
        %v1036 = vmul.f32 1.0, %v1035
        %v1037 = vrcp.pop %v945
        %v1038 = vmul.f32 %v945, %v1037
        %v1039 = vsub.f32 1.0, %v1038
        %v1040 = vmul.f32 %v1037, %v1039
        %v1041 = vadd.f32 %v1037, %v1040
        %vm1042 = vweird.f32 %v945
        %vm1043 = vweird.f32 %v1037
        %vm1044 = vmor %vm1042, %vm1043
        %v1045 = vsel %vm1044, %v1037, %v1041
        %v1046 = vand.u32 2147483647, %v945
        %vm1047 = vcmp.eq.f32.partialorder %v1046, 8.507059e+37
        %v1048 = vand.u32 %v945, 2147483648
        %v1049 = vor.u32 1.1754944e-38, %v1048
        %v1050 = vsel %vm1047, %v1049, %v1045
        %v1051 = vmul.f32 1.0, %v1050
        %v1052 = vrcp.pop %v946
        %v1053 = vmul.f32 %v946, %v1052
        %v1054 = vsub.f32 1.0, %v1053
        %v1055 = vmul.f32 %v1052, %v1054
        %v1056 = vadd.f32 %v1052, %v1055
        %vm1057 = vweird.f32 %v946
        %vm1058 = vweird.f32 %v1052
        %vm1059 = vmor %vm1057, %vm1058
        %v1060 = vsel %vm1059, %v1052, %v1056
        %v1061 = vand.u32 2147483647, %v946
        %vm1062 = vcmp.eq.f32.partialorder %v1061, 8.507059e+37
        %v1063 = vand.u32 %v946, 2147483648
        %v1064 = vor.u32 1.1754944e-38, %v1063
        %v1065 = vsel %vm1062, %v1064, %v1060
        %v1066 = vmul.f32 1.0, %v1065
        %v1067 = vld [vmem:[%s6] sm:$0xff]
        %v1068 = vld [vmem:[%s6 + $0x8] sm:$0xff]
        %v1069 = vld [vmem:[%s6 + $0x10] sm:$0xff]
        %v1070 = vld [vmem:[%s6 + $0x18] sm:$0xff]
        %v1071 = vld [vmem:[%s6 + $0x20] sm:$0xff]
        %v1072 = vld [vmem:[%s6 + $0x28] sm:$0xff]
        %v1073 = vld [vmem:[%s6 + $0x30] sm:$0xff]
        %v1074 = vld [vmem:[%s6 + $0x38] sm:$0xff]
        %v1075 = vld [vmem:[%s6 + $0x40] sm:$0xff]
        %v1076 = vld [vmem:[%s6 + $0x48] sm:$0xff]
        %v1077 = vld [vmem:[%s6 + $0x50] sm:$0xff]
        %v1078 = vld [vmem:[%s6 + $0x58] sm:$0xff]
        %v1079 = vld [vmem:[%s6 + $0x60] sm:$0xff]
        %v1080 = vld [vmem:[%s6 + $0x68] sm:$0xff]
        %v1081 = vld [vmem:[%s6 + $0x70] sm:$0xff]
        %v1082 = vld [vmem:[%s6 + $0x78] sm:$0xff]
        %1083 = vmatpush.msra.mxu0 %v1082
        %1084 = vmatpush.msra.mxu0 %v1081
        %1085 = vmatpush.msra.mxu0 %v1080
        %1086 = vmatpush.msra.mxu0 %v1079
        %1087 = vmatpush.msra.mxu0 %v1078
        %1088 = vmatpush.msra.mxu0 %v1077
        %1089 = vmatpush.msra.mxu0 %v1076
        %1090 = vmatpush.msra.mxu0 %v1075
        %1091 = vmatpush.msra.mxu0 %v1074
        %1092 = vmatpush.msra.mxu0 %v1073
        %1093 = vmatpush.msra.mxu0 %v1072
        %1094 = vmatpush.msra.mxu0 %v1071
        %1095 = vmatpush.msra.mxu0 %v1070
        %1096 = vmatpush.msra.mxu0 %v1069
        %1097 = vmatpush.msra.mxu0 %v1068
        %1098 = vmatpush.msra.mxu0 %v1067
        %1099 = vmatmul.f32.gmra.mxu0 %v576
        %v1100 = vpop.f32.mrf.mxu0
        %v1101 = vadd.f32 0.0, %v1100
        %1102 = vmatmul.f32.gmra.mxu0 %v577
        %v1103 = vpop.f32.mrf.mxu0
        %v1104 = vadd.f32 0.0, %v1103
        %1105 = vmatmul.f32.gmra.mxu0 %v578
        %v1106 = vpop.f32.mrf.mxu0
        %v1107 = vadd.f32 0.0, %v1106
        %1108 = vmatmul.f32.gmra.mxu0 %v579
        %v1109 = vpop.f32.mrf.mxu0
        %v1110 = vadd.f32 0.0, %v1109
        %1111 = vmatmul.f32.gmra.mxu0 %v580
        %v1112 = vpop.f32.mrf.mxu0
        %v1113 = vadd.f32 0.0, %v1112
        %1114 = vmatmul.f32.gmra.mxu0 %v581
        %v1115 = vpop.f32.mrf.mxu0
        %v1116 = vadd.f32 0.0, %v1115
        %1117 = vmatmul.f32.gmra.mxu0 %v582
        %v1118 = vpop.f32.mrf.mxu0
        %v1119 = vadd.f32 0.0, %v1118
        %1120 = vmatmul.f32.gmra.mxu0 %v583
        %v1121 = vpop.f32.mrf.mxu0
        %v1122 = vadd.f32 0.0, %v1121
        %1123 = vdwg.mxu0
        %v1124 = vmul.f32 %v961, %v1101
        %v1125 = vmul.f32 %v976, %v1104
        %v1126 = vmul.f32 %v991, %v1107
        %v1127 = vmul.f32 %v1006, %v1110
        %v1128 = vmul.f32 %v1021, %v1113
        %v1129 = vmul.f32 %v1036, %v1116
        %v1130 = vmul.f32 %v1051, %v1119
        %v1131 = vmul.f32 %v1066, %v1122
        %v1132 = vld [vmem:[%s7] sm:$0xff]
        %v1133 = vld [vmem:[%s7 + $0x8] sm:$0xff]
        %v1134 = vld [vmem:[%s7 + $0x10] sm:$0xff]
        %v1135 = vld [vmem:[%s7 + $0x18] sm:$0xff]
        %v1136 = vld [vmem:[%s7 + $0x20] sm:$0xff]
        %v1137 = vld [vmem:[%s7 + $0x28] sm:$0xff]
        %v1138 = vld [vmem:[%s7 + $0x30] sm:$0xff]
        %v1139 = vld [vmem:[%s7 + $0x38] sm:$0xff]
        %v1140 = vld [vmem:[%s7 + $0x40] sm:$0xff]
        %v1141 = vld [vmem:[%s7 + $0x48] sm:$0xff]
        %v1142 = vld [vmem:[%s7 + $0x50] sm:$0xff]
        %v1143 = vld [vmem:[%s7 + $0x58] sm:$0xff]
        %v1144 = vld [vmem:[%s7 + $0x60] sm:$0xff]
        %v1145 = vld [vmem:[%s7 + $0x68] sm:$0xff]
        %v1146 = vld [vmem:[%s7 + $0x70] sm:$0xff]
        %v1147 = vld [vmem:[%s7 + $0x78] sm:$0xff]
        %1148 = vmatpush.msra.mxu0 %v1147
        %1149 = vmatpush.msra.mxu0 %v1146
        %1150 = vmatpush.msra.mxu0 %v1145
        %1151 = vmatpush.msra.mxu0 %v1144
        %1152 = vmatpush.msra.mxu0 %v1143
        %1153 = vmatpush.msra.mxu0 %v1142
        %1154 = vmatpush.msra.mxu0 %v1141
        %1155 = vmatpush.msra.mxu0 %v1140
        %1156 = vmatpush.msra.mxu0 %v1139
        %1157 = vmatpush.msra.mxu0 %v1138
        %1158 = vmatpush.msra.mxu0 %v1137
        %1159 = vmatpush.msra.mxu0 %v1136
        %1160 = vmatpush.msra.mxu0 %v1135
        %1161 = vmatpush.msra.mxu0 %v1134
        %1162 = vmatpush.msra.mxu0 %v1133
        %1163 = vmatpush.msra.mxu0 %v1132
        %1164 = vmatmul.f32.gmra.mxu0 %v576
        %v1165 = vpop.f32.mrf.mxu0
        %v1166 = vadd.f32 0.0, %v1165
        %1167 = vmatmul.f32.gmra.mxu0 %v577
        %v1168 = vpop.f32.mrf.mxu0
        %v1169 = vadd.f32 0.0, %v1168
        %1170 = vmatmul.f32.gmra.mxu0 %v578
        %v1171 = vpop.f32.mrf.mxu0
        %v1172 = vadd.f32 0.0, %v1171
        %1173 = vmatmul.f32.gmra.mxu0 %v579
        %v1174 = vpop.f32.mrf.mxu0
        %v1175 = vadd.f32 0.0, %v1174
        %1176 = vmatmul.f32.gmra.mxu0 %v580
        %v1177 = vpop.f32.mrf.mxu0
        %v1178 = vadd.f32 0.0, %v1177
        %1179 = vmatmul.f32.gmra.mxu0 %v581
        %v1180 = vpop.f32.mrf.mxu0
        %v1181 = vadd.f32 0.0, %v1180
        %1182 = vmatmul.f32.gmra.mxu0 %v582
        %v1183 = vpop.f32.mrf.mxu0
        %v1184 = vadd.f32 0.0, %v1183
        %1185 = vmatmul.f32.gmra.mxu0 %v583
        %v1186 = vpop.f32.mrf.mxu0
        %v1187 = vadd.f32 0.0, %v1186
        %1188 = vdwg.mxu0
        %v1189 = vsub.f32 0.0, %v1166
        %v1190 = vsub.f32 0.0, %v1169
        %v1191 = vsub.f32 0.0, %v1172
        %v1192 = vsub.f32 0.0, %v1175
        %v1193 = vsub.f32 0.0, %v1178
        %v1194 = vsub.f32 0.0, %v1181
        %v1195 = vsub.f32 0.0, %v1184
        %v1196 = vsub.f32 0.0, %v1187
        %v1197 = vmul.f32 %v1189, 1.442695
        %v1198 = vpow.pop %v1197
        %v1199 = vmul.f32 %v1190, 1.442695
        %v1200 = vpow.pop %v1199
        %v1201 = vmul.f32 %v1191, 1.442695
        %v1202 = vpow.pop %v1201
        %v1203 = vmul.f32 %v1192, 1.442695
        %v1204 = vpow.pop %v1203
        %v1205 = vmul.f32 %v1193, 1.442695
        %v1206 = vpow.pop %v1205
        %v1207 = vmul.f32 %v1194, 1.442695
        %v1208 = vpow.pop %v1207
        %v1209 = vmul.f32 %v1195, 1.442695
        %v1210 = vpow.pop %v1209
        %v1211 = vmul.f32 %v1196, 1.442695
        %v1212 = vpow.pop %v1211
        %v1213 = vadd.f32 %v1198, 1.0
        %v1214 = vadd.f32 %v1200, 1.0
        %v1215 = vadd.f32 %v1202, 1.0
        %v1216 = vadd.f32 %v1204, 1.0
        %v1217 = vadd.f32 %v1206, 1.0
        %v1218 = vadd.f32 %v1208, 1.0
        %v1219 = vadd.f32 %v1210, 1.0
        %v1220 = vadd.f32 %v1212, 1.0
        %v1221 = vrcp.pop %v1213
        %v1222 = vmul.f32 %v1213, %v1221
        %v1223 = vsub.f32 1.0, %v1222
        %v1224 = vmul.f32 %v1221, %v1223
        %v1225 = vadd.f32 %v1221, %v1224
        %vm1226 = vweird.f32 %v1213
        %vm1227 = vweird.f32 %v1221
        %vm1228 = vmor %vm1226, %vm1227
        %v1229 = vsel %vm1228, %v1221, %v1225
        %v1230 = vand.u32 2147483647, %v1213
        %vm1231 = vcmp.eq.f32.partialorder %v1230, 8.507059e+37
        %v1232 = vand.u32 %v1213, 2147483648
        %v1233 = vor.u32 1.1754944e-38, %v1232
        %v1234 = vsel %vm1231, %v1233, %v1229
        %v1235 = vmul.f32 1.0, %v1234
        %v1236 = vrcp.pop %v1214
        %v1237 = vmul.f32 %v1214, %v1236
        %v1238 = vsub.f32 1.0, %v1237
        %v1239 = vmul.f32 %v1236, %v1238
        %v1240 = vadd.f32 %v1236, %v1239
        %vm1241 = vweird.f32 %v1214
        %vm1242 = vweird.f32 %v1236
        %vm1243 = vmor %vm1241, %vm1242
        %v1244 = vsel %vm1243, %v1236, %v1240
        %v1245 = vand.u32 2147483647, %v1214
        %vm1246 = vcmp.eq.f32.partialorder %v1245, 8.507059e+37
        %v1247 = vand.u32 %v1214, 2147483648
        %v1248 = vor.u32 1.1754944e-38, %v1247
        %v1249 = vsel %vm1246, %v1248, %v1244
        %v1250 = vmul.f32 1.0, %v1249
        %v1251 = vrcp.pop %v1215
        %v1252 = vmul.f32 %v1215, %v1251
        %v1253 = vsub.f32 1.0, %v1252
        %v1254 = vmul.f32 %v1251, %v1253
        %v1255 = vadd.f32 %v1251, %v1254
        %vm1256 = vweird.f32 %v1215
        %vm1257 = vweird.f32 %v1251
        %vm1258 = vmor %vm1256, %vm1257
        %v1259 = vsel %vm1258, %v1251, %v1255
        %v1260 = vand.u32 2147483647, %v1215
        %vm1261 = vcmp.eq.f32.partialorder %v1260, 8.507059e+37
        %v1262 = vand.u32 %v1215, 2147483648
        %v1263 = vor.u32 1.1754944e-38, %v1262
        %v1264 = vsel %vm1261, %v1263, %v1259
        %v1265 = vmul.f32 1.0, %v1264
        %v1266 = vrcp.pop %v1216
        %v1267 = vmul.f32 %v1216, %v1266
        %v1268 = vsub.f32 1.0, %v1267
        %v1269 = vmul.f32 %v1266, %v1268
        %v1270 = vadd.f32 %v1266, %v1269
        %vm1271 = vweird.f32 %v1216
        %vm1272 = vweird.f32 %v1266
        %vm1273 = vmor %vm1271, %vm1272
        %v1274 = vsel %vm1273, %v1266, %v1270
        %v1275 = vand.u32 2147483647, %v1216
        %vm1276 = vcmp.eq.f32.partialorder %v1275, 8.507059e+37
        %v1277 = vand.u32 %v1216, 2147483648
        %v1278 = vor.u32 1.1754944e-38, %v1277
        %v1279 = vsel %vm1276, %v1278, %v1274
        %v1280 = vmul.f32 1.0, %v1279
        %v1281 = vrcp.pop %v1217
        %v1282 = vmul.f32 %v1217, %v1281
        %v1283 = vsub.f32 1.0, %v1282
        %v1284 = vmul.f32 %v1281, %v1283
        %v1285 = vadd.f32 %v1281, %v1284
        %vm1286 = vweird.f32 %v1217
        %vm1287 = vweird.f32 %v1281
        %vm1288 = vmor %vm1286, %vm1287
        %v1289 = vsel %vm1288, %v1281, %v1285
        %v1290 = vand.u32 2147483647, %v1217
        %vm1291 = vcmp.eq.f32.partialorder %v1290, 8.507059e+37
        %v1292 = vand.u32 %v1217, 2147483648
        %v1293 = vor.u32 1.1754944e-38, %v1292
        %v1294 = vsel %vm1291, %v1293, %v1289
        %v1295 = vmul.f32 1.0, %v1294
        %v1296 = vrcp.pop %v1218
        %v1297 = vmul.f32 %v1218, %v1296
        %v1298 = vsub.f32 1.0, %v1297
        %v1299 = vmul.f32 %v1296, %v1298
        %v1300 = vadd.f32 %v1296, %v1299
        %vm1301 = vweird.f32 %v1218
        %vm1302 = vweird.f32 %v1296
        %vm1303 = vmor %vm1301, %vm1302
        %v1304 = vsel %vm1303, %v1296, %v1300
        %v1305 = vand.u32 2147483647, %v1218
        %vm1306 = vcmp.eq.f32.partialorder %v1305, 8.507059e+37
        %v1307 = vand.u32 %v1218, 2147483648
        %v1308 = vor.u32 1.1754944e-38, %v1307
        %v1309 = vsel %vm1306, %v1308, %v1304
        %v1310 = vmul.f32 1.0, %v1309
        %v1311 = vrcp.pop %v1219
        %v1312 = vmul.f32 %v1219, %v1311
        %v1313 = vsub.f32 1.0, %v1312
        %v1314 = vmul.f32 %v1311, %v1313
        %v1315 = vadd.f32 %v1311, %v1314
        %vm1316 = vweird.f32 %v1219
        %vm1317 = vweird.f32 %v1311
        %vm1318 = vmor %vm1316, %vm1317
        %v1319 = vsel %vm1318, %v1311, %v1315
        %v1320 = vand.u32 2147483647, %v1219
        %vm1321 = vcmp.eq.f32.partialorder %v1320, 8.507059e+37
        %v1322 = vand.u32 %v1219, 2147483648
        %v1323 = vor.u32 1.1754944e-38, %v1322
        %v1324 = vsel %vm1321, %v1323, %v1319
        %v1325 = vmul.f32 1.0, %v1324
        %v1326 = vrcp.pop %v1220
        %v1327 = vmul.f32 %v1220, %v1326
        %v1328 = vsub.f32 1.0, %v1327
        %v1329 = vmul.f32 %v1326, %v1328
        %v1330 = vadd.f32 %v1326, %v1329
        %vm1331 = vweird.f32 %v1220
        %vm1332 = vweird.f32 %v1326
        %vm1333 = vmor %vm1331, %vm1332
        %v1334 = vsel %vm1333, %v1326, %v1330
        %v1335 = vand.u32 2147483647, %v1220
        %vm1336 = vcmp.eq.f32.partialorder %v1335, 8.507059e+37
        %v1337 = vand.u32 %v1220, 2147483648
        %v1338 = vor.u32 1.1754944e-38, %v1337
        %v1339 = vsel %vm1336, %v1338, %v1334
        %v1340 = vmul.f32 1.0, %v1339
        %v1342 = vrot.slane %v850, 1
        %v1343 = vrot.slane %v850, 2
        %v1344 = vrot.slane %v850, 3
        %v1345 = vrot.slane %v850, 4
        %v1346 = vrot.slane %v850, 5
        %v1347 = vrot.slane %v850, 6
        %v1348 = vrot.slane %v850, 7
        %v1349 = vperm.slane %v850, 0
        %v1350 = vperm.slane %v1342, 0
        %v1351 = vperm.slane %v1343, 0
        %v1352 = vperm.slane %v1344, 0
        %v1353 = vperm.slane %v1345, 0
        %v1354 = vperm.slane %v1346, 0
        %v1355 = vperm.slane %v1347, 0
        %v1356 = vperm.slane %v1348, 0
        %v1365 = vmul.f32 %v1349, %v1124
        %v1366 = vmul.f32 %v1350, %v1124
        %v1367 = vmul.f32 %v1351, %v1124
        %v1368 = vmul.f32 %v1352, %v1124
        %v1369 = vmul.f32 %v1353, %v1124
        %v1370 = vmul.f32 %v1354, %v1124
        %v1371 = vmul.f32 %v1355, %v1124
        %v1372 = vmul.f32 %v1356, %v1124
        %v1374 = vrot.slane %v851, 1
        %v1375 = vrot.slane %v851, 2
        %v1376 = vrot.slane %v851, 3
        %v1377 = vrot.slane %v851, 4
        %v1378 = vrot.slane %v851, 5
        %v1379 = vrot.slane %v851, 6
        %v1380 = vrot.slane %v851, 7
        %v1381 = vperm.slane %v851, 0
        %v1382 = vperm.slane %v1374, 0
        %v1383 = vperm.slane %v1375, 0
        %v1384 = vperm.slane %v1376, 0
        %v1385 = vperm.slane %v1377, 0
        %v1386 = vperm.slane %v1378, 0
        %v1387 = vperm.slane %v1379, 0
        %v1388 = vperm.slane %v1380, 0
        %v1397 = vmul.f32 %v1381, %v1125
        %v1398 = vmul.f32 %v1382, %v1125
        %v1399 = vmul.f32 %v1383, %v1125
        %v1400 = vmul.f32 %v1384, %v1125
        %v1401 = vmul.f32 %v1385, %v1125
        %v1402 = vmul.f32 %v1386, %v1125
        %v1403 = vmul.f32 %v1387, %v1125
        %v1404 = vmul.f32 %v1388, %v1125
        %v1405 = vadd.f32 %v1365, %v1397
        %v1406 = vadd.f32 %v1366, %v1398
        %v1407 = vadd.f32 %v1367, %v1399
        %v1408 = vadd.f32 %v1368, %v1400
        %v1409 = vadd.f32 %v1369, %v1401
        %v1410 = vadd.f32 %v1370, %v1402
        %v1411 = vadd.f32 %v1371, %v1403
        %v1412 = vadd.f32 %v1372, %v1404
        %v1414 = vrot.slane %v852, 1
        %v1415 = vrot.slane %v852, 2
        %v1416 = vrot.slane %v852, 3
        %v1417 = vrot.slane %v852, 4
        %v1418 = vrot.slane %v852, 5
        %v1419 = vrot.slane %v852, 6
        %v1420 = vrot.slane %v852, 7
        %v1421 = vperm.slane %v852, 0
        %v1422 = vperm.slane %v1414, 0
        %v1423 = vperm.slane %v1415, 0
        %v1424 = vperm.slane %v1416, 0
        %v1425 = vperm.slane %v1417, 0
        %v1426 = vperm.slane %v1418, 0
        %v1427 = vperm.slane %v1419, 0
        %v1428 = vperm.slane %v1420, 0
        %v1437 = vmul.f32 %v1421, %v1126
        %v1438 = vmul.f32 %v1422, %v1126
        %v1439 = vmul.f32 %v1423, %v1126
        %v1440 = vmul.f32 %v1424, %v1126
        %v1441 = vmul.f32 %v1425, %v1126
        %v1442 = vmul.f32 %v1426, %v1126
        %v1443 = vmul.f32 %v1427, %v1126
        %v1444 = vmul.f32 %v1428, %v1126
        %v1445 = vadd.f32 %v1405, %v1437
        %v1446 = vadd.f32 %v1406, %v1438
        %v1447 = vadd.f32 %v1407, %v1439
        %v1448 = vadd.f32 %v1408, %v1440
        %v1449 = vadd.f32 %v1409, %v1441
        %v1450 = vadd.f32 %v1410, %v1442
        %v1451 = vadd.f32 %v1411, %v1443
        %v1452 = vadd.f32 %v1412, %v1444
        %v1454 = vrot.slane %v853, 1
        %v1455 = vrot.slane %v853, 2
        %v1456 = vrot.slane %v853, 3
        %v1457 = vrot.slane %v853, 4
        %v1458 = vrot.slane %v853, 5
        %v1459 = vrot.slane %v853, 6
        %v1460 = vrot.slane %v853, 7
        %v1461 = vperm.slane %v853, 0
        %v1462 = vperm.slane %v1454, 0
        %v1463 = vperm.slane %v1455, 0
        %v1464 = vperm.slane %v1456, 0
        %v1465 = vperm.slane %v1457, 0
        %v1466 = vperm.slane %v1458, 0
        %v1467 = vperm.slane %v1459, 0
        %v1468 = vperm.slane %v1460, 0
        %v1477 = vmul.f32 %v1461, %v1127
        %v1478 = vmul.f32 %v1462, %v1127
        %v1479 = vmul.f32 %v1463, %v1127
        %v1480 = vmul.f32 %v1464, %v1127
        %v1481 = vmul.f32 %v1465, %v1127
        %v1482 = vmul.f32 %v1466, %v1127
        %v1483 = vmul.f32 %v1467, %v1127
        %v1484 = vmul.f32 %v1468, %v1127
        %v1485 = vadd.f32 %v1445, %v1477
        %v1486 = vadd.f32 %v1446, %v1478
        %v1487 = vadd.f32 %v1447, %v1479
        %v1488 = vadd.f32 %v1448, %v1480
        %v1489 = vadd.f32 %v1449, %v1481
        %v1490 = vadd.f32 %v1450, %v1482
        %v1491 = vadd.f32 %v1451, %v1483
        %v1492 = vadd.f32 %v1452, %v1484
        %v1494 = vrot.slane %v854, 1
        %v1495 = vrot.slane %v854, 2
        %v1496 = vrot.slane %v854, 3
        %v1497 = vrot.slane %v854, 4
        %v1498 = vrot.slane %v854, 5
        %v1499 = vrot.slane %v854, 6
        %v1500 = vrot.slane %v854, 7
        %v1501 = vperm.slane %v854, 0
        %v1502 = vperm.slane %v1494, 0
        %v1503 = vperm.slane %v1495, 0
        %v1504 = vperm.slane %v1496, 0
        %v1505 = vperm.slane %v1497, 0
        %v1506 = vperm.slane %v1498, 0
        %v1507 = vperm.slane %v1499, 0
        %v1508 = vperm.slane %v1500, 0
        %v1517 = vmul.f32 %v1501, %v1128
        %v1518 = vmul.f32 %v1502, %v1128
        %v1519 = vmul.f32 %v1503, %v1128
        %v1520 = vmul.f32 %v1504, %v1128
        %v1521 = vmul.f32 %v1505, %v1128
        %v1522 = vmul.f32 %v1506, %v1128
        %v1523 = vmul.f32 %v1507, %v1128
        %v1524 = vmul.f32 %v1508, %v1128
        %v1525 = vadd.f32 %v1485, %v1517
        %v1526 = vadd.f32 %v1486, %v1518
        %v1527 = vadd.f32 %v1487, %v1519
        %v1528 = vadd.f32 %v1488, %v1520
        %v1529 = vadd.f32 %v1489, %v1521
        %v1530 = vadd.f32 %v1490, %v1522
        %v1531 = vadd.f32 %v1491, %v1523
        %v1532 = vadd.f32 %v1492, %v1524
        %v1534 = vrot.slane %v855, 1
        %v1535 = vrot.slane %v855, 2
        %v1536 = vrot.slane %v855, 3
        %v1537 = vrot.slane %v855, 4
        %v1538 = vrot.slane %v855, 5
        %v1539 = vrot.slane %v855, 6
        %v1540 = vrot.slane %v855, 7
        %v1541 = vperm.slane %v855, 0
        %v1542 = vperm.slane %v1534, 0
        %v1543 = vperm.slane %v1535, 0
        %v1544 = vperm.slane %v1536, 0
        %v1545 = vperm.slane %v1537, 0
        %v1546 = vperm.slane %v1538, 0
        %v1547 = vperm.slane %v1539, 0
        %v1548 = vperm.slane %v1540, 0
        %v1557 = vmul.f32 %v1541, %v1129
        %v1558 = vmul.f32 %v1542, %v1129
        %v1559 = vmul.f32 %v1543, %v1129
        %v1560 = vmul.f32 %v1544, %v1129
        %v1561 = vmul.f32 %v1545, %v1129
        %v1562 = vmul.f32 %v1546, %v1129
        %v1563 = vmul.f32 %v1547, %v1129
        %v1564 = vmul.f32 %v1548, %v1129
        %v1565 = vadd.f32 %v1525, %v1557
        %v1566 = vadd.f32 %v1526, %v1558
        %v1567 = vadd.f32 %v1527, %v1559
        %v1568 = vadd.f32 %v1528, %v1560
        %v1569 = vadd.f32 %v1529, %v1561
        %v1570 = vadd.f32 %v1530, %v1562
        %v1571 = vadd.f32 %v1531, %v1563
        %v1572 = vadd.f32 %v1532, %v1564
        %v1574 = vrot.slane %v856, 1
        %v1575 = vrot.slane %v856, 2
        %v1576 = vrot.slane %v856, 3
        %v1577 = vrot.slane %v856, 4
        %v1578 = vrot.slane %v856, 5
        %v1579 = vrot.slane %v856, 6
        %v1580 = vrot.slane %v856, 7
        %v1581 = vperm.slane %v856, 0
        %v1582 = vperm.slane %v1574, 0
        %v1583 = vperm.slane %v1575, 0
        %v1584 = vperm.slane %v1576, 0
        %v1585 = vperm.slane %v1577, 0
        %v1586 = vperm.slane %v1578, 0
        %v1587 = vperm.slane %v1579, 0
        %v1588 = vperm.slane %v1580, 0
        %v1597 = vmul.f32 %v1581, %v1130
        %v1598 = vmul.f32 %v1582, %v1130
        %v1599 = vmul.f32 %v1583, %v1130
        %v1600 = vmul.f32 %v1584, %v1130
        %v1601 = vmul.f32 %v1585, %v1130
        %v1602 = vmul.f32 %v1586, %v1130
        %v1603 = vmul.f32 %v1587, %v1130
        %v1604 = vmul.f32 %v1588, %v1130
        %v1605 = vadd.f32 %v1565, %v1597
        %v1606 = vadd.f32 %v1566, %v1598
        %v1607 = vadd.f32 %v1567, %v1599
        %v1608 = vadd.f32 %v1568, %v1600
        %v1609 = vadd.f32 %v1569, %v1601
        %v1610 = vadd.f32 %v1570, %v1602
        %v1611 = vadd.f32 %v1571, %v1603
        %v1612 = vadd.f32 %v1572, %v1604
        %v1614 = vrot.slane %v857, 1
        %v1615 = vrot.slane %v857, 2
        %v1616 = vrot.slane %v857, 3
        %v1617 = vrot.slane %v857, 4
        %v1618 = vrot.slane %v857, 5
        %v1619 = vrot.slane %v857, 6
        %v1620 = vrot.slane %v857, 7
        %v1621 = vperm.slane %v857, 0
        %v1622 = vperm.slane %v1614, 0
        %v1623 = vperm.slane %v1615, 0
        %v1624 = vperm.slane %v1616, 0
        %v1625 = vperm.slane %v1617, 0
        %v1626 = vperm.slane %v1618, 0
        %v1627 = vperm.slane %v1619, 0
        %v1628 = vperm.slane %v1620, 0
        %v1637 = vmul.f32 %v1621, %v1131
        %v1638 = vmul.f32 %v1622, %v1131
        %v1639 = vmul.f32 %v1623, %v1131
        %v1640 = vmul.f32 %v1624, %v1131
        %v1641 = vmul.f32 %v1625, %v1131
        %v1642 = vmul.f32 %v1626, %v1131
        %v1643 = vmul.f32 %v1627, %v1131
        %v1644 = vmul.f32 %v1628, %v1131
        %v1645 = vadd.f32 %v1605, %v1637
        %v1646 = vadd.f32 %v1606, %v1638
        %v1647 = vadd.f32 %v1607, %v1639
        %v1648 = vadd.f32 %v1608, %v1640
        %v1649 = vadd.f32 %v1609, %v1641
        %v1650 = vadd.f32 %v1610, %v1642
        %v1651 = vadd.f32 %v1611, %v1643
        %v1652 = vadd.f32 %v1612, %v1644
        %v1653 = vld [vmem:[%s8] sm:$0x1]
        %v1654 = vld [vmem:[%s9] sm:$0x1]
        %vm1655 = vcmask 261120
        %v1656 = vsel %vm1655, %v1645, 0.0
        %1657 = vadd.xlane.f32.xlu0 %v1656
        %v1658 = vpop.xlane.xlu0 %1657
        %v1659 = vsel %vm1655, %v1646, 0.0
        %1660 = vadd.xlane.f32.xlu0 %v1659
        %v1661 = vpop.xlane.xlu0 %1660
        %v1662 = vsel %vm1655, %v1647, 0.0
        %1663 = vadd.xlane.f32.xlu0 %v1662
        %v1664 = vpop.xlane.xlu0 %1663
        %v1665 = vsel %vm1655, %v1648, 0.0
        %1666 = vadd.xlane.f32.xlu0 %v1665
        %v1667 = vpop.xlane.xlu0 %1666
        %v1668 = vsel %vm1655, %v1649, 0.0
        %1669 = vadd.xlane.f32.xlu0 %v1668
        %v1670 = vpop.xlane.xlu0 %1669
        %v1671 = vsel %vm1655, %v1650, 0.0
        %1672 = vadd.xlane.f32.xlu0 %v1671
        %v1673 = vpop.xlane.xlu0 %1672
        %v1674 = vsel %vm1655, %v1651, 0.0
        %1675 = vadd.xlane.f32.xlu0 %v1674
        %v1676 = vpop.xlane.xlu0 %1675
        %v1677 = vsel %vm1655, %v1652, 0.0
        %1678 = vadd.xlane.f32.xlu0 %v1677
        %v1679 = vpop.xlane.xlu0 %1678
        %v1680 = vrcp.pop 32.0
        %v1681 = vmul.f32 32.0, %v1680
        %v1682 = vsub.f32 1.0, %v1681
        %v1683 = vmul.f32 %v1680, %v1682
        %v1684 = vadd.f32 %v1680, %v1683
        %vm1685 = vweird.f32 %v1680
        %v1686 = vsel %vm1685, %v1680, %v1684
        %v1687 = vmul.f32 %v1658, %v1686
        %v1688 = vmul.f32 %v1661, %v1686
        %v1689 = vmul.f32 %v1664, %v1686
        %v1690 = vmul.f32 %v1667, %v1686
        %v1691 = vmul.f32 %v1670, %v1686
        %v1692 = vmul.f32 %v1673, %v1686
        %v1693 = vmul.f32 %v1676, %v1686
        %v1694 = vmul.f32 %v1679, %v1686
        %v1695 = vsub.f32 %v1645, %v1687
        %v1696 = vsub.f32 %v1646, %v1688
        %v1697 = vsub.f32 %v1647, %v1689
        %v1698 = vsub.f32 %v1648, %v1690
        %v1699 = vsub.f32 %v1649, %v1691
        %v1700 = vsub.f32 %v1650, %v1692
        %v1701 = vsub.f32 %v1651, %v1693
        %v1702 = vsub.f32 %v1652, %v1694
        %v1703 = vmul.f32 %v1695, %v1695
        %v1704 = vmul.f32 %v1696, %v1696
        %v1705 = vmul.f32 %v1697, %v1697
        %v1706 = vmul.f32 %v1698, %v1698
        %v1707 = vmul.f32 %v1699, %v1699
        %v1708 = vmul.f32 %v1700, %v1700
        %v1709 = vmul.f32 %v1701, %v1701
        %v1710 = vmul.f32 %v1702, %v1702
        %v1711 = vsel %vm1655, %v1703, 0.0
        %1712 = vadd.xlane.f32.xlu0 %v1711
        %v1713 = vpop.xlane.xlu0 %1712
        %v1714 = vsel %vm1655, %v1704, 0.0
        %1715 = vadd.xlane.f32.xlu0 %v1714
        %v1716 = vpop.xlane.xlu0 %1715
        %v1717 = vsel %vm1655, %v1705, 0.0
        %1718 = vadd.xlane.f32.xlu0 %v1717
        %v1719 = vpop.xlane.xlu0 %1718
        %v1720 = vsel %vm1655, %v1706, 0.0
        %1721 = vadd.xlane.f32.xlu0 %v1720
        %v1722 = vpop.xlane.xlu0 %1721
        %v1723 = vsel %vm1655, %v1707, 0.0
        %1724 = vadd.xlane.f32.xlu0 %v1723
        %v1725 = vpop.xlane.xlu0 %1724
        %v1726 = vsel %vm1655, %v1708, 0.0
        %1727 = vadd.xlane.f32.xlu0 %v1726
        %v1728 = vpop.xlane.xlu0 %1727
        %v1729 = vsel %vm1655, %v1709, 0.0
        %1730 = vadd.xlane.f32.xlu0 %v1729
        %v1731 = vpop.xlane.xlu0 %1730
        %v1732 = vsel %vm1655, %v1710, 0.0
        %1733 = vadd.xlane.f32.xlu0 %v1732
        %v1734 = vpop.xlane.xlu0 %1733
        %v1735 = vmul.f32 %v1713, %v1686
        %v1736 = vmul.f32 %v1716, %v1686
        %v1737 = vmul.f32 %v1719, %v1686
        %v1738 = vmul.f32 %v1722, %v1686
        %v1739 = vmul.f32 %v1725, %v1686
        %v1740 = vmul.f32 %v1728, %v1686
        %v1741 = vmul.f32 %v1731, %v1686
        %v1742 = vmul.f32 %v1734, %v1686
        %v1743 = vadd.f32 %v1735, 1e-05
        %v1744 = vadd.f32 %v1736, 1e-05
        %v1745 = vadd.f32 %v1737, 1e-05
        %v1746 = vadd.f32 %v1738, 1e-05
        %v1747 = vadd.f32 %v1739, 1e-05
        %v1748 = vadd.f32 %v1740, 1e-05
        %v1749 = vadd.f32 %v1741, 1e-05
        %v1750 = vadd.f32 %v1742, 1e-05
        %v1751 = vrsqrt.pop %v1743
        %v1752 = vmul.f32 %v1751, %v1743
        %v1753 = vmul.f32 %v1752, %v1751
        %v1754 = vmul.f32 0.5, %v1753
        %v1755 = vsub.f32 1.5, %v1754
        %v1756 = vmul.f32 %v1751, %v1755
        %vm1757 = vweird.f32 %v1743
        %vm1758 = vweird.f32 %v1751
        %vm1759 = vmor %vm1757, %vm1758
        %v1760 = vsel %vm1759, %v1751, %v1756
        %v1761 = vrsqrt.pop %v1744
        %v1762 = vmul.f32 %v1761, %v1744
        %v1763 = vmul.f32 %v1762, %v1761
        %v1764 = vmul.f32 0.5, %v1763
        %v1765 = vsub.f32 1.5, %v1764
        %v1766 = vmul.f32 %v1761, %v1765
        %vm1767 = vweird.f32 %v1744
        %vm1768 = vweird.f32 %v1761
        %vm1769 = vmor %vm1767, %vm1768
        %v1770 = vsel %vm1769, %v1761, %v1766
        %v1771 = vrsqrt.pop %v1745
        %v1772 = vmul.f32 %v1771, %v1745
        %v1773 = vmul.f32 %v1772, %v1771
        %v1774 = vmul.f32 0.5, %v1773
        %v1775 = vsub.f32 1.5, %v1774
        %v1776 = vmul.f32 %v1771, %v1775
        %vm1777 = vweird.f32 %v1745
        %vm1778 = vweird.f32 %v1771
        %vm1779 = vmor %vm1777, %vm1778
        %v1780 = vsel %vm1779, %v1771, %v1776
        %v1781 = vrsqrt.pop %v1746
        %v1782 = vmul.f32 %v1781, %v1746
        %v1783 = vmul.f32 %v1782, %v1781
        %v1784 = vmul.f32 0.5, %v1783
        %v1785 = vsub.f32 1.5, %v1784
        %v1786 = vmul.f32 %v1781, %v1785
        %vm1787 = vweird.f32 %v1746
        %vm1788 = vweird.f32 %v1781
        %vm1789 = vmor %vm1787, %vm1788
        %v1790 = vsel %vm1789, %v1781, %v1786
        %v1791 = vrsqrt.pop %v1747
        %v1792 = vmul.f32 %v1791, %v1747
        %v1793 = vmul.f32 %v1792, %v1791
        %v1794 = vmul.f32 0.5, %v1793
        %v1795 = vsub.f32 1.5, %v1794
        %v1796 = vmul.f32 %v1791, %v1795
        %vm1797 = vweird.f32 %v1747
        %vm1798 = vweird.f32 %v1791
        %vm1799 = vmor %vm1797, %vm1798
        %v1800 = vsel %vm1799, %v1791, %v1796
        %v1801 = vrsqrt.pop %v1748
        %v1802 = vmul.f32 %v1801, %v1748
        %v1803 = vmul.f32 %v1802, %v1801
        %v1804 = vmul.f32 0.5, %v1803
        %v1805 = vsub.f32 1.5, %v1804
        %v1806 = vmul.f32 %v1801, %v1805
        %vm1807 = vweird.f32 %v1748
        %vm1808 = vweird.f32 %v1801
        %vm1809 = vmor %vm1807, %vm1808
        %v1810 = vsel %vm1809, %v1801, %v1806
        %v1811 = vrsqrt.pop %v1749
        %v1812 = vmul.f32 %v1811, %v1749
        %v1813 = vmul.f32 %v1812, %v1811
        %v1814 = vmul.f32 0.5, %v1813
        %v1815 = vsub.f32 1.5, %v1814
        %v1816 = vmul.f32 %v1811, %v1815
        %vm1817 = vweird.f32 %v1749
        %vm1818 = vweird.f32 %v1811
        %vm1819 = vmor %vm1817, %vm1818
        %v1820 = vsel %vm1819, %v1811, %v1816
        %v1821 = vrsqrt.pop %v1750
        %v1822 = vmul.f32 %v1821, %v1750
        %v1823 = vmul.f32 %v1822, %v1821
        %v1824 = vmul.f32 0.5, %v1823
        %v1825 = vsub.f32 1.5, %v1824
        %v1826 = vmul.f32 %v1821, %v1825
        %vm1827 = vweird.f32 %v1750
        %vm1828 = vweird.f32 %v1821
        %vm1829 = vmor %vm1827, %vm1828
        %v1830 = vsel %vm1829, %v1821, %v1826
        %v1831 = vmul.f32 %v1695, %v1760
        %v1832 = vmul.f32 %v1696, %v1770
        %v1833 = vmul.f32 %v1697, %v1780
        %v1834 = vmul.f32 %v1698, %v1790
        %v1835 = vmul.f32 %v1699, %v1800
        %v1836 = vmul.f32 %v1700, %v1810
        %v1837 = vmul.f32 %v1701, %v1820
        %v1838 = vmul.f32 %v1702, %v1830
        %v1840 = vperm.slane %v1653, 0
        %v1842 = vmul.f32 %v1831, %v1840
        %v1843 = vmul.f32 %v1832, %v1840
        %v1844 = vmul.f32 %v1833, %v1840
        %v1845 = vmul.f32 %v1834, %v1840
        %v1846 = vmul.f32 %v1835, %v1840
        %v1847 = vmul.f32 %v1836, %v1840
        %v1848 = vmul.f32 %v1837, %v1840
        %v1849 = vmul.f32 %v1838, %v1840
        %v1851 = vperm.slane %v1654, 0
        %v1853 = vadd.f32 %v1842, %v1851
        %v1854 = vadd.f32 %v1843, %v1851
        %v1855 = vadd.f32 %v1844, %v1851
        %v1856 = vadd.f32 %v1845, %v1851
        %v1857 = vadd.f32 %v1846, %v1851
        %v1858 = vadd.f32 %v1847, %v1851
        %v1859 = vadd.f32 %v1848, %v1851
        %v1860 = vadd.f32 %v1849, %v1851
        %v1861 = vld [vmem:[%s10] sm:$0xff]
        %v1862 = vld [vmem:[%s10 + $0x8] sm:$0xff]
        %v1863 = vld [vmem:[%s10 + $0x10] sm:$0xff]
        %v1864 = vld [vmem:[%s10 + $0x18] sm:$0xff]
        %v1866 = vsel %vm1655, %v1853, 0
        %v1869 = vsel %vm1655, %v1854, 0
        %v1872 = vsel %vm1655, %v1855, 0
        %v1875 = vsel %vm1655, %v1856, 0
        %v1878 = vsel %vm1655, %v1857, 0
        %v1881 = vsel %vm1655, %v1858, 0
        %v1884 = vsel %vm1655, %v1859, 0
        %v1887 = vsel %vm1655, %v1860, 0
        %1889 = vmatpush.msra.mxu0 0.0
        %1890 = vmatpush.msra.mxu0 0.0
        %1891 = vmatpush.msra.mxu0 0.0
        %1892 = vmatpush.msra.mxu0 0.0
        %1893 = vmatpush.msra.mxu0 0.0
        %1894 = vmatpush.msra.mxu0 0.0
        %1895 = vmatpush.msra.mxu0 0.0
        %1896 = vmatpush.msra.mxu0 0.0
        %1897 = vmatpush.msra.mxu0 0.0
        %1898 = vmatpush.msra.mxu0 0.0
        %1899 = vmatpush.msra.mxu0 0.0
        %1900 = vmatpush.msra.mxu0 0.0
        %1901 = vmatpush.msra.mxu0 %v1864
        %1902 = vmatpush.msra.mxu0 %v1863
        %1903 = vmatpush.msra.mxu0 %v1862
        %1904 = vmatpush.msra.mxu0 %v1861
        %1905 = vmatmul.f32.gmra.mxu0 %v1866
        %v1906 = vpop.f32.mrf.mxu0
        %v1907 = vadd.f32 0.0, %v1906
        %1908 = vmatmul.f32.gmra.mxu0 %v1869
        %v1909 = vpop.f32.mrf.mxu0
        %v1910 = vadd.f32 0.0, %v1909
        %1911 = vmatmul.f32.gmra.mxu0 %v1872
        %v1912 = vpop.f32.mrf.mxu0
        %v1913 = vadd.f32 0.0, %v1912
        %1914 = vmatmul.f32.gmra.mxu0 %v1875
        %v1915 = vpop.f32.mrf.mxu0
        %v1916 = vadd.f32 0.0, %v1915
        %1917 = vmatmul.f32.gmra.mxu0 %v1878
        %v1918 = vpop.f32.mrf.mxu0
        %v1919 = vadd.f32 0.0, %v1918
        %1920 = vmatmul.f32.gmra.mxu0 %v1881
        %v1921 = vpop.f32.mrf.mxu0
        %v1922 = vadd.f32 0.0, %v1921
        %1923 = vmatmul.f32.gmra.mxu0 %v1884
        %v1924 = vpop.f32.mrf.mxu0
        %v1925 = vadd.f32 0.0, %v1924
        %1926 = vmatmul.f32.gmra.mxu0 %v1887
        %v1927 = vpop.f32.mrf.mxu0
        %v1928 = vadd.f32 0.0, %v1927
        %1929 = vdwg.mxu0
        %v1930 = vmul.f32 %v1235, %v1907
        %v1931 = vmul.f32 %v1250, %v1910
        %v1932 = vmul.f32 %v1265, %v1913
        %v1933 = vmul.f32 %v1280, %v1916
        %v1934 = vmul.f32 %v1295, %v1919
        %v1935 = vmul.f32 %v1310, %v1922
        %v1936 = vmul.f32 %v1325, %v1925
        %v1937 = vmul.f32 %v1340, %v1928
        %1938 = vst [vmem:[%s379] sm:$0xff] %v1930
        %1939 = vst [vmem:[%s379 + $0x8] sm:$0xff] %v1931
        %1940 = vst [vmem:[%s379 + $0x10] sm:$0xff] %v1932
        %1941 = vst [vmem:[%s379 + $0x18] sm:$0xff] %v1933
        %1942 = vst [vmem:[%s379 + $0x20] sm:$0xff] %v1934
        %1943 = vst [vmem:[%s379 + $0x28] sm:$0xff] %v1935
        %1944 = vst [vmem:[%s379 + $0x30] sm:$0xff] %v1936
        %1945 = vst [vmem:[%s379 + $0x38] sm:$0xff] %v1937
        %s1946 = sand.u32 %s269, 1
        %s1947 = scalar_lea.sflag [#allocation3], %s1946
        %s1948 = sand.u32 %s269, 1
        %s1949 = smul.addr %s1948, 64
        %s1950 = scalar_lea.vmem [#allocation2], %s1949
        // Predicated region
        $region65: #{tpu_custom_call.1} parent=63 // pred_check
          %p1951 = pneg %p279
        $region66: #{tpu_custom_call.1} parent=63 // pred_check_branch
          %1953 = sbr.rel (%p1951) target = $region68
        $region67: #{tpu_custom_call.1} parent=63 // pred_region
          %1955 = vsyncadd %s1947, 0
          %s1956 = smul.addr %s25, 8
          %s1957 = smul.addr %s1956, 8
          %s1958 = scalar_lea.hbm %s11, %s1957
          %s1959 = sshll.u32 %s1950, 4
          %s1960 = int_to_ptr.vmem [resolvable:$true] %s1959
          %s1961 = sshll.u32 %s1958, 4
          %s1962 = int_to_ptr.hbm [resolvable:$true] %s1961
          %1967 = dma.vmem_to_hbm [thread:$0]  %s1960, 1024, %s1962, %s1947, 128, 128, 8
        $region68: #{tpu_custom_call.1} parent=63 // pred_fallthru
          _
      $region64: #{tpu_custom_call.1} parent=5 // pred_fallthru
        _
      %p1968 = scmp.le.s32.totalorder 2, %s20
      // Predicated region
      $region69: #{tpu_custom_call.1} parent=5 // pred_check
        %p1969 = pneg %p1968
      $region70: #{tpu_custom_call.1} parent=5 // pred_check_branch
        %1971 = sbr.rel (%p1969) target = $region72
      $region71: #{tpu_custom_call.1} parent=5 // pred_region
        %s1972 = ssub.s32 %s20, 2
        // Predicated region
        $region73: #{tpu_custom_call.1} parent=71 // pred_check
          %p1973 = pneg %p285
        $region74: #{tpu_custom_call.1} parent=71 // pred_check_branch
          %1975 = sbr.rel (%p1973) target = $region76
        $region75: #{tpu_custom_call.1} parent=71 // pred_region
          %s1976 = sand.u32 %s270, 1
          %s1977 = scalar_lea.sflag [#allocation3], %s1976
          %s1978 = sand.u32 %s270, 1
          %s1979 = smul.addr %s1978, 64
          %s1980 = scalar_lea.vmem [#allocation2], %s1979
          %1982 = dma.done %s1977, 1024
        $region76: #{tpu_custom_call.1} parent=71 // pred_fallthru
          _
      $region72: #{tpu_custom_call.1} parent=5 // pred_fallthru
        _
    $region6: #{tpu_custom_call.1} parent=1 // loop_footer
      %s24 = sadd.s32 1, %s20
    $region7: #{tpu_custom_call.1} parent=1 // loop_footer_branch
      %19 = sbr.rel target = $region3
    $region8: #{tpu_custom_call.1} parent=1 // loop_exit
      _
    %1983 = vsyncpa [#allocation3], 1
    %s1984 = scalar_lea.sflag [#allocation3], 1
    %1985 = vsyncpa %s1984, 1

</llo_original>
